<compile_context>
chip_gen: v7x
topology: tpu7x:2x2x1
jax: 0.10.0
libtpu: 0.0.40
codegen_flags: <defaults>
</compile_context>

<pallas_src>
import functools
import math

import jax
import jax.numpy as jnp
from jax.experimental import pallas as pl
from jax.experimental.pallas import tpu as pltpu


def _mhsa_kernel(x_ref, wqkv_ref, bqkv_ref, head_mask_ref, sum_mask_ref,
                 wo_ref, bo_ref, o_ref, qkv_ref, *,
                 num_heads, c_out, f_in, t, g, gc):
    ht = num_heads * t
    rows_c = gc * t

    # Constant operands: load once per grid step, hoisted out of the chunk loop.
    wqkv = wqkv_ref[...]            # (F_in, 3*C_out)
    bqkv = bqkv_ref[...]            # (1, 3*C_out)
    head_mask = head_mask_ref[...]  # (H*T, C_out)  = kron(I_H, ones(T, d_k))
    sum_mask = sum_mask_ref[...]    # (H*T, H*T)    = kron(I_H, ones(T, T))
    wo = wo_ref[...]                # (C_out, C_out)
    bo = bo_ref[...]                # (1, C_out)

    def chunk(ci, carry):
        s0 = ci * gc
        # Native-layout slab (gc, F_in, T) -> minor-dim transpose (XLU is idle
        # here) -> (rows_c, F_in).  No HBM-side transpose needed.
        xc = jnp.swapaxes(x_ref[pl.ds(s0, gc), :, :], 1, 2).reshape(rows_c, f_in)

        # Fused QKV projection (attention scale pre-folded into the Q columns),
        # f32 accumulation, staged in VMEM scratch to bound vreg live ranges.
        qkv_ref[...] = (jnp.dot(xc, wqkv, preferred_element_type=jnp.float32)
                        + bqkv)
        q = qkv_ref[:, :c_out].reshape(gc, t, c_out)            # (gc, T, C)
        k = qkv_ref[:, c_out:2 * c_out].reshape(gc, t, c_out)
        v = qkv_ref[:, 2 * c_out:].reshape(gc, t, c_out)

        # Block-diagonal head expansion: one batched matmul pair covers ALL
        # heads (replaces the per-head Python loop / per-head MXU pushes).
        k_exp = jnp.concatenate([k] * num_heads, axis=1) * head_mask  # (gc, H*T, C)
        v_exp = jnp.concatenate([v] * num_heads, axis=1) * head_mask  # (gc, H*T, C)

        # scores[g, t, (h, s)] = <Q_h[t, :], K_h[s, :]> (scale already folded in)
        s = jnp.einsum('gtc,gxc->gtx', q, k_exp,
                       preferred_element_type=jnp.float32)            # (gc, T, H*T)
        # Row max is constant within each head's group of T lanes, so the
        # per-head softmax is unchanged by subtracting it.
        s = s - jnp.max(s, axis=-1, keepdims=True)
        p = jnp.exp(s)
        # Per-head denominators, broadcast back over the (h, s) lanes by one
        # tiny constant matmul.  Exact reciprocal keeps f32-level agreement.
        denom = jnp.dot(p.reshape(rows_c, ht), sum_mask,
                        preferred_element_type=jnp.float32).reshape(gc, t, ht)
        p = p * pl.reciprocal(denom, approx=False)
        # TODO(synk): nn.Dropout(p=0.1) on attn weights — eval/inference identity.

        ctx = jnp.einsum('gtx,gxc->gtc', p, v_exp,
                         preferred_element_type=jnp.float32)           # (gc, T, C)

        # Single output projection for all heads, then emit the module's native
        # channels-first layout directly (no wrapper-side transpose).
        out = jnp.dot(ctx.reshape(rows_c, c_out).astype(wo.dtype), wo,
                      preferred_element_type=jnp.float32) + bo          # (rows_c, C)
        o_ref[pl.ds(s0, gc), :, :] = jnp.swapaxes(
            out.reshape(gc, t, c_out), 1, 2).astype(o_ref.dtype)
        return carry

    num_chunks = g // gc
    if num_chunks == 1:
        chunk(0, 0)
    else:
        jax.lax.fori_loop(0, num_chunks, chunk, 0)


def _pad(v, m):
    return -(-v // m) * m


def _device_info():
    """(tensorcores_per_chip, VMEM budget) with conservative fallbacks."""
    kind = ""
    try:
        kind = jax.devices()[0].device_kind.lower()
    except Exception:
        pass
    multi_core = any(s in kind for s in ("v4", "v5p", "v7"))
    num_cores = 2 if multi_core else 1
    if any(s in kind for s in ("v4", "v5e", "v5 lite", "v5p", "v6")):
        vmem_budget = 96 << 20          # 128 MiB physical VMEM
    else:
        vmem_budget = 40 << 20          # v7x (64 MiB physical) / unknown: conservative
    return num_cores, vmem_budget


def _rows_cap(f_in, c_out, num_heads, t, in_itemsize, vmem_budget):
    """Max rows (= G*T) per grid step from padded-VMEM footprint of the blocks
    plus the dominant in-kernel intermediates (last dim padded to 128 lanes)."""
    ht = num_heads * t
    lane_t, lane_c, lane_ht = _pad(t, 128), _pad(c_out, 128), _pad(ht, 128)
    per_slab = (2 * _pad(f_in, 8) * lane_t * in_itemsize    # x block (double-buffered)
                + 2 * _pad(c_out, 8) * lane_t * 4           # out block (double-buffered)
                + 2 * _pad(ht, 8) * lane_c * 4              # k_exp / v_exp
                + 3 * _pad(t, 8) * lane_ht * 4              # scores / p / denom
                + 4 * _pad(t, 8) * lane_c * 4)              # q / k / v / ctx
    per_row = per_slab // max(t, 1) + 3 * _pad(3 * c_out, 128) * 4  # + qkv scratch etc.
    cap = int(vmem_budget * 0.6) // max(per_row, 1)
    return max(t, min(cap, 4096))


def _largest_divisor_leq(n, cap):
    cap = max(1, min(cap, n))
    d = cap
    while n % d:
        d -= 1
    return d


def _choose_group(s, g_cap):
    """Largest divisor of s <= g_cap; if that degrades badly (e.g. prime s),
    return g_cap and let the caller pad s up to a multiple of it."""
    g_cap = max(1, min(g_cap, s))
    g = _largest_divisor_leq(s, g_cap)
    if g < (g_cap + 1) // 2:
        return g_cap
    return g


def multi_head_self_attention(x, params, *, num_heads, compute_dtype=None):
    """x: (B, N, F_in, T) -> output: (B, N, C_out, T)  (matches PyTorch module).

    compute_dtype=jnp.bfloat16 casts x / W_qkv / W_o for the v6e/v7x fast path
    (half the HBM traffic, 2x MXU rate); accumulation stays in f32.
    """
    B, N, F_in, T = x.shape
    wq, bq, wk, bk, wv, bv, wo, bo = params
    C_out = wq.shape[1]
    assert C_out % num_heads == 0
    d_k = C_out // num_heads
    scale = 1.0 / math.sqrt(d_k)
    cdt = jnp.dtype(compute_dtype) if compute_dtype is not None else x.dtype

    # Fused QKV weights; attention scale folded into the Q projection.
    wqkv = jnp.concatenate([wq * scale, wk, wv], axis=1).astype(cdt)   # (F_in, 3*C_out)
    bqkv = jnp.concatenate([bq * scale, bk, bv], axis=1).astype(jnp.float32)
    wo_c = wo.astype(cdt)
    bo_c = bo.astype(jnp.float32)

    # Constant 0/1 masks implementing the block-diagonal (per-head) structure.
    eye_h = jnp.eye(num_heads, dtype=jnp.float32)
    head_mask = jnp.kron(eye_h, jnp.ones((T, d_k), jnp.float32))   # (H*T, C_out)
    sum_mask = jnp.kron(eye_h, jnp.ones((T, T), jnp.float32))      # (H*T, H*T)

    # Native layout in, native layout out: only leading-dim collapses (free).
    S = B * N
    x_s = x.reshape(S, F_in, T).astype(cdt)

    num_cores, vmem_budget = _device_info()
    rows_cap = _rows_cap(F_in, C_out, num_heads, T, jnp.dtype(cdt).itemsize,
                         vmem_budget)
    g_cap = max(1, rows_cap // T)
    if num_cores > 1 and S >= num_cores:
        # Keep >= num_cores grid steps only where the chip has >1 TensorCore
        # (v4/v5p/v7x); on v5e/v6e the grid is a serial loop, so use max blocks.
        g_cap = min(g_cap, max(1, S // num_cores))
    G = _choose_group(S, g_cap)
    S_pad = -(-S // G) * G
    if S_pad != S:            # pathological S (e.g. prime): pad, don't shrink G
        x_s = jnp.pad(x_s, ((0, S_pad - S), (0, 0), (0, 0)))
    num_steps = S_pad // G
    # Row-chunk size for the in-kernel loop (bounds vreg live ranges as G grows).
    GC = _largest_divisor_leq(G, max(1, 256 // max(T, 1)))

    kernel = functools.partial(_mhsa_kernel, num_heads=num_heads, c_out=C_out,
                               f_in=F_in, t=T, g=G, gc=GC)

    ht = num_heads * T
    out = pl.pallas_call(
        kernel,
        out_shape=jax.ShapeDtypeStruct((S_pad, C_out, T), x.dtype),
        grid_spec=pltpu.PrefetchScalarGridSpec(
            num_scalar_prefetch=0,
            grid=(num_steps,),
            in_specs=[
                pl.BlockSpec((G, F_in, T), lambda i: (i, 0, 0)),       # x slabs
                # Constant operands (weights / biases / masks).  These would
                # ideally use pipeline_mode=pl.Buffered(1) to skip pointless
                # double-buffering; they total a few KiB so it is omitted.
                pl.BlockSpec((F_in, 3 * C_out), lambda i: (0, 0)),     # W_qkv
                pl.BlockSpec((1, 3 * C_out), lambda i: (0, 0)),        # b_qkv
                pl.BlockSpec((ht, C_out), lambda i: (0, 0)),           # head mask
                pl.BlockSpec((ht, ht), lambda i: (0, 0)),              # sum mask
                pl.BlockSpec((C_out, C_out), lambda i: (0, 0)),        # W_o
                pl.BlockSpec((1, C_out), lambda i: (0, 0)),            # b_o
            ],
            out_specs=pl.BlockSpec((G, C_out, T), lambda i: (i, 0, 0)),
            scratch_shapes=[pltpu.VMEM((GC * T, 3 * C_out), jnp.float32)],
        ),
        compiler_params=pltpu.CompilerParams(
            dimension_semantics=("parallel",),
            vmem_limit_bytes=vmem_budget,
        ),
    )(x_s, wqkv, bqkv, head_mask, sum_mask, wo_c, bo_c)

    if S_pad != S:
        out = out[:S]
    return out.reshape(B, N, C_out, T)


def _reference(x, params, *, num_heads):
    """Pure-JAX replica of the PyTorch forward (f32, highest matmul precision)."""
    wq, bq, wk, bk, wv, bv, wo, bo = params
    B, N, F_in, T = x.shape
    C_out = wq.shape[1]
    d_k = C_out // num_heads
    hi = jax.lax.Precision.HIGHEST
    xr = jnp.transpose(x, (0, 3, 1, 2))                       # (B, T, N, F_in)

    def proj(w, b):
        y = jnp.einsum('btnf,fc->btnc', xr, w, precision=hi) + b[0]
        y = y.reshape(B, T, N, num_heads, d_k)
        return jnp.transpose(y, (0, 2, 3, 1, 4))              # (B, N, H, T, d_k)

    Q, K, V = proj(wq, bq), proj(wk, bk), proj(wv, bv)
    scores = jnp.einsum('bnhtd,bnhsd->bnhts', Q, K, precision=hi) / math.sqrt(d_k)
    attn = jax.nn.softmax(scores, axis=-1)
    ctx = jnp.einsum('bnhts,bnhsd->bnhtd', attn, V, precision=hi)
    ctx = jnp.transpose(ctx, (0, 3, 1, 2, 4)).reshape(B, T, N, C_out)
    out = jnp.einsum('btnc,cd->btnd', ctx, wo, precision=hi) + bo[0]
    return jnp.transpose(out, (0, 2, 3, 1))                   # (B, N, C_out, T)


def init_params(key, in_channels, out_channels):
    ks = jax.random.split(key, 8)
    s_in = 1.0 / math.sqrt(in_channels)
    s_out = 1.0 / math.sqrt(out_channels)
    # Linear weights stored pre-transposed: (in, out), biases as (1, out).
    wq = jax.random.uniform(ks[0], (in_channels, out_channels), jnp.float32, -s_in, s_in)
    bq = jax.random.uniform(ks[1], (1, out_channels), jnp.float32, -s_in, s_in)
    wk = jax.random.uniform(ks[2], (in_channels, out_channels), jnp.float32, -s_in, s_in)
    bk = jax.random.uniform(ks[3], (1, out_channels), jnp.float32, -s_in, s_in)
    wv = jax.random.uniform(ks[4], (in_channels, out_channels), jnp.float32, -s_in, s_in)
    bv = jax.random.uniform(ks[5], (1, out_channels), jnp.float32, -s_in, s_in)
    wo = jax.random.uniform(ks[6], (out_channels, out_channels), jnp.float32, -s_out, s_out)
    bo = jax.random.uniform(ks[7], (1, out_channels), jnp.float32, -s_out, s_out)
    return (wq, bq, wk, bk, wv, bv, wo, bo)


if __name__ == "__main__":
    B, N, F_in, T = 2, 4, 16, 8          # x: (batch, nodes, in_channels, time)
    C_out, H = 32, 4

    key = jax.random.PRNGKey(0)
    kx, kp = jax.random.split(key)
    x = jax.random.normal(kx, (B, N, F_in, T), dtype=jnp.float32)
    params = init_params(kp, F_in, C_out)

    out = multi_head_self_attention(x, params, num_heads=H)
    out = jax.block_until_ready(out)

    ref = _reference(x, params, num_heads=H)
    assert out.shape == (B, N, C_out, T)
    max_err = float(jnp.max(jnp.abs(out - ref)))
    # Exact (non-approx) softmax reciprocal + f32 accumulation -> tight match.
    assert jnp.allclose(out, ref, atol=1e-3, rtol=1e-3), \
        f"mismatch vs reference (max|diff|={max_err})"

    print("KERNEL_OK")
</pallas_src>

<mosaic_0001>
module attributes {stable_mosaic.version = 11 : i64} {
  func.func @_mhsa_kernel(%arg0: i32, %arg1: memref<8x16x8xf32, #tpu.memory_space<vmem>>, %arg2: memref<16x96xf32, #tpu.memory_space<vmem>>, %arg3: memref<1x96xf32, #tpu.memory_space<vmem>>, %arg4: memref<32x32xf32, #tpu.memory_space<vmem>>, %arg5: memref<32x32xf32, #tpu.memory_space<vmem>>, %arg6: memref<32x32xf32, #tpu.memory_space<vmem>>, %arg7: memref<1x32xf32, #tpu.memory_space<vmem>>, %arg8: memref<8x32x8xf32, #tpu.memory_space<vmem>>, %arg9: memref<64x96xf32, #tpu.memory_space<vmem>>) attributes {dimension_semantics = [#tpu.dimension_semantics<parallel>], iteration_bounds = array<i64: 1>, scalar_prefetch = 0 : i64, scratch_operands = 1 : i64, tpu.core_type = #tpu.core_type<tc>, window_params = [{transform_indices = @transform_0, window_bounds = array<i64: 8, 16, 8>}, {pipeline_mode = #tpu.pipeline_mode<synchronous>, transform_indices = @transform_1, window_bounds = array<i64: 16, 96>}, {pipeline_mode = #tpu.pipeline_mode<synchronous>, transform_indices = @transform_2, window_bounds = array<i64: 1, 96>}, {pipeline_mode = #tpu.pipeline_mode<synchronous>, transform_indices = @transform_3, window_bounds = array<i64: 32, 32>}, {pipeline_mode = #tpu.pipeline_mode<synchronous>, transform_indices = @transform_4, window_bounds = array<i64: 32, 32>}, {pipeline_mode = #tpu.pipeline_mode<synchronous>, transform_indices = @transform_5, window_bounds = array<i64: 32, 32>}, {pipeline_mode = #tpu.pipeline_mode<synchronous>, transform_indices = @transform_6, window_bounds = array<i64: 1, 32>}, {transform_indices = @transform_7, window_bounds = array<i64: 8, 32, 8>}]} {
    %c0 = arith.constant 0 : index
    %c0_0 = arith.constant 0 : index
    %0 = vector.load %arg2[%c0, %c0_0] : memref<16x96xf32, #tpu.memory_space<vmem>>, vector<16x96xf32>
    %c0_1 = arith.constant 0 : index
    %c0_2 = arith.constant 0 : index
    %1 = vector.load %arg3[%c0_1, %c0_2] : memref<1x96xf32, #tpu.memory_space<vmem>>, vector<1x96xf32>
    %c0_3 = arith.constant 0 : index
    %c0_4 = arith.constant 0 : index
    %2 = vector.load %arg4[%c0_3, %c0_4] : memref<32x32xf32, #tpu.memory_space<vmem>>, vector<32x32xf32>
    %c0_5 = arith.constant 0 : index
    %c0_6 = arith.constant 0 : index
    %3 = vector.load %arg5[%c0_5, %c0_6] : memref<32x32xf32, #tpu.memory_space<vmem>>, vector<32x32xf32>
    %c0_7 = arith.constant 0 : index
    %c0_8 = arith.constant 0 : index
    %4 = vector.load %arg6[%c0_7, %c0_8] : memref<32x32xf32, #tpu.memory_space<vmem>>, vector<32x32xf32>
    %c0_9 = arith.constant 0 : index
    %c0_10 = arith.constant 0 : index
    %5 = vector.load %arg7[%c0_9, %c0_10] : memref<1x32xf32, #tpu.memory_space<vmem>>, vector<1x32xf32>
    %c0_11 = arith.constant 0 : index
    %c0_12 = arith.constant 0 : index
    %c0_13 = arith.constant 0 : index
    %6 = vector.load %arg1[%c0_11, %c0_12, %c0_13] : memref<8x16x8xf32, #tpu.memory_space<vmem>>, vector<8x16x8xf32>
    %7 = tpu.transpose %6, [0, 2, 1] : vector<8x16x8xf32> -> vector<8x8x16xf32>
    %8 = vector.shape_cast %7 : vector<8x8x16xf32> to vector<64x16xf32>
    %cst = arith.constant dense<0.000000e+00> : vector<64x96xf32>
    %9 = tpu.matmul %8, %0, %cst {dimension_numbers = #tpu.dot_dimension_numbers<[1], [0], [0], [1], [0, 0, 1, 1], [], []>} : vector<64x16xf32>, vector<16x96xf32>, vector<64x96xf32> -> vector<64x96xf32>
    %10 = vector.broadcast %1 : vector<1x96xf32> to vector<64x96xf32>
    %11 = arith.addf %9, %10 : vector<64x96xf32>
    %c0_14 = arith.constant 0 : index
    %c0_15 = arith.constant 0 : index
    %12 = vector.load %arg9[%c0_14, %c0_15] : memref<64x96xf32, #tpu.memory_space<vmem>>, vector<64x96xf32>
    tpu.vector_store %arg9[%c0_14, %c0_15], %11 {strides = array<i32>} : memref<64x96xf32, #tpu.memory_space<vmem>>, vector<64x96xf32>,
    %c0_16 = arith.constant 0 : index
    %c0_17 = arith.constant 0 : index
    %13 = vector.load %arg9[%c0_16, %c0_17] : memref<64x96xf32, #tpu.memory_space<vmem>>, vector<64x32xf32>
    %14 = vector.shape_cast %13 : vector<64x32xf32> to vector<8x8x32xf32>
    %c0_18 = arith.constant 0 : index
    %c32 = arith.constant 32 : index
    %15 = vector.load %arg9[%c0_18, %c32] : memref<64x96xf32, #tpu.memory_space<vmem>>, vector<64x32xf32>
    %16 = vector.shape_cast %15 : vector<64x32xf32> to vector<8x8x32xf32>
    %c0_19 = arith.constant 0 : index
    %c64 = arith.constant 64 : index
    %17 = vector.load %arg9[%c0_19, %c64] : memref<64x96xf32, #tpu.memory_space<vmem>>, vector<64x32xf32>
    %18 = vector.shape_cast %17 : vector<64x32xf32> to vector<8x8x32xf32>
    %19 = tpu.concatenate %16, %16, %16, %16 in 1 : vector<8x8x32xf32>, vector<8x8x32xf32>, vector<8x8x32xf32>, vector<8x8x32xf32> -> vector<8x32x32xf32>
    %20 = vector.shape_cast %2 : vector<32x32xf32> to vector<1x32x32xf32>
    %21 = vector.broadcast %20 : vector<1x32x32xf32> to vector<8x32x32xf32>
    %22 = arith.mulf %19, %21 : vector<8x32x32xf32>
    %23 = tpu.concatenate %18, %18, %18, %18 in 1 : vector<8x8x32xf32>, vector<8x8x32xf32>, vector<8x8x32xf32>, vector<8x8x32xf32> -> vector<8x32x32xf32>
    %24 = vector.shape_cast %2 : vector<32x32xf32> to vector<1x32x32xf32>
    %25 = vector.broadcast %24 : vector<1x32x32xf32> to vector<8x32x32xf32>
    %26 = arith.mulf %23, %25 : vector<8x32x32xf32>
    "tpu.trace_start"() <{level = 10 : i32, message = "gtc,gxc->gtx"}> : () -> ()
    %cst_20 = arith.constant dense<0.000000e+00> : vector<8x8x32xf32>
    %27 = tpu.matmul %14, %22, %cst_20 {dimension_numbers = #tpu.dot_dimension_numbers<[2], [2], [1], [1], [0, 0, 0, 1, 1, 1], [0], [0]>} : vector<8x8x32xf32>, vector<8x32x32xf32>, vector<8x8x32xf32> -> vector<8x8x32xf32>
    "tpu.trace_stop"() : () -> ()
    %cst_21 = arith.constant dense<0xFF800000> : vector<8x8xf32>
    %28 = vector.multi_reduction <maximumf>, %27, %cst_21 [2] : vector<8x8x32xf32> to vector<8x8xf32>
    %29 = vector.shape_cast %28 : vector<8x8xf32> to vector<8x8x1xf32>
    %30 = vector.broadcast %29 : vector<8x8x1xf32> to vector<8x8x32xf32>
    %31 = arith.subf %27, %30 : vector<8x8x32xf32>
    %32 = math.exp %31 : vector<8x8x32xf32>
    %33 = vector.shape_cast %32 : vector<8x8x32xf32> to vector<64x32xf32>
    %cst_22 = arith.constant dense<0.000000e+00> : vector<64x32xf32>
    %34 = tpu.matmul %33, %3, %cst_22 {dimension_numbers = #tpu.dot_dimension_numbers<[1], [0], [0], [1], [0, 0, 1, 1], [], []>} : vector<64x32xf32>, vector<32x32xf32>, vector<64x32xf32> -> vector<64x32xf32>
    %35 = vector.shape_cast %34 : vector<64x32xf32> to vector<8x8x32xf32>
    %36 = tpu.reciprocal %35 : vector<8x8x32xf32> -> vector<8x8x32xf32>
    %37 = arith.mulf %32, %36 : vector<8x8x32xf32>
    "tpu.trace_start"() <{level = 10 : i32, message = "gtx,gxc->gtc"}> : () -> ()
    %cst_23 = arith.constant dense<0.000000e+00> : vector<8x8x32xf32>
    %38 = tpu.matmul %37, %26, %cst_23 {dimension_numbers = #tpu.dot_dimension_numbers<[2], [1], [1], [2], [0, 0, 0, 1, 1, 2], [0], [0]>} : vector<8x8x32xf32>, vector<8x32x32xf32>, vector<8x8x32xf32> -> vector<8x8x32xf32>
    "tpu.trace_stop"() : () -> ()
    %39 = vector.shape_cast %38 : vector<8x8x32xf32> to vector<64x32xf32>
    %cst_24 = arith.constant dense<0.000000e+00> : vector<64x32xf32>
    %40 = tpu.matmul %39, %4, %cst_24 {dimension_numbers = #tpu.dot_dimension_numbers<[1], [0], [0], [1], [0, 0, 1, 1], [], []>} : vector<64x32xf32>, vector<32x32xf32>, vector<64x32xf32> -> vector<64x32xf32>
    %41 = vector.broadcast %5 : vector<1x32xf32> to vector<64x32xf32>
    %42 = arith.addf %40, %41 : vector<64x32xf32>
    %43 = vector.shape_cast %42 : vector<64x32xf32> to vector<8x8x32xf32>
    %44 = tpu.transpose %43, [0, 2, 1] : vector<8x8x32xf32> -> vector<8x32x8xf32>
    %c0_25 = arith.constant 0 : index
    %c0_26 = arith.constant 0 : index
    %c0_27 = arith.constant 0 : index
    %45 = vector.load %arg8[%c0_25, %c0_26, %c0_27] : memref<8x32x8xf32, #tpu.memory_space<vmem>>, vector<8x32x8xf32>
    tpu.vector_store %arg8[%c0_25, %c0_26, %c0_27], %44 {strides = array<i32>} : memref<8x32x8xf32, #tpu.memory_space<vmem>>, vector<8x32x8xf32>,
    return
  }
  func.func @transform_0(%arg0: i32) -> (i32, i32, i32) {
    %c0_i32 = arith.constant 0 : i32
    %c0_i32_0 = arith.constant 0 : i32
    %c0_i32_1 = arith.constant 0 : i32
    return %arg0, %c0_i32, %c0_i32_0 : i32, i32, i32
  }
  func.func @transform_1(%arg0: i32) -> (i32, i32) {
    %c0_i32 = arith.constant 0 : i32
    %c0_i32_0 = arith.constant 0 : i32
    %c0_i32_1 = arith.constant 0 : i32
    return %c0_i32, %c0_i32_0 : i32, i32
  }
  func.func @transform_2(%arg0: i32) -> (i32, i32) {
    %c0_i32 = arith.constant 0 : i32
    %c0_i32_0 = arith.constant 0 : i32
    %c0_i32_1 = arith.constant 0 : i32
    return %c0_i32, %c0_i32_0 : i32, i32
  }
  func.func @transform_3(%arg0: i32) -> (i32, i32) {
    %c0_i32 = arith.constant 0 : i32
    %c0_i32_0 = arith.constant 0 : i32
    %c0_i32_1 = arith.constant 0 : i32
    return %c0_i32, %c0_i32_0 : i32, i32
  }
  func.func @transform_4(%arg0: i32) -> (i32, i32) {
    %c0_i32 = arith.constant 0 : i32
    %c0_i32_0 = arith.constant 0 : i32
    %c0_i32_1 = arith.constant 0 : i32
    return %c0_i32, %c0_i32_0 : i32, i32
  }
  func.func @transform_5(%arg0: i32) -> (i32, i32) {
    %c0_i32 = arith.constant 0 : i32
    %c0_i32_0 = arith.constant 0 : i32
    %c0_i32_1 = arith.constant 0 : i32
    return %c0_i32, %c0_i32_0 : i32, i32
  }
  func.func @transform_6(%arg0: i32) -> (i32, i32) {
    %c0_i32 = arith.constant 0 : i32
    %c0_i32_0 = arith.constant 0 : i32
    %c0_i32_1 = arith.constant 0 : i32
    return %c0_i32, %c0_i32_0 : i32, i32
  }
  func.func @transform_7(%arg0: i32) -> (i32, i32, i32) {
    %c0_i32 = arith.constant 0 : i32
    %c0_i32_0 = arith.constant 0 : i32
    %c0_i32_1 = arith.constant 0 : i32
    return %arg0, %c0_i32, %c0_i32_0 : i32, i32, i32
  }
}

</mosaic_0001>

<llo_original>
// kernel: tpu_custom_call.1
$region0: #{tpu_custom_call.1}
  #allocation0 [shape = 'u32[]', space=smem, size = 0x4, offset = 0x4, fixed_abs, tag = 'smem constant byte address 0x4 - core index']
  #allocation1 [shape = 'u32[144,128]{1,0:T(1,128)}', space=vmem, size = 0x12000, scoped, tag = 'internal scratch']
  #allocation2 [shape = 'f32[64,96]{1,0:T(8,128)}', space=vmem, size = 0x8000, scoped, tag = 'scratch operand']
  %s0 = inlined_call_operand.vmem [shape: f32[8,16,8], index: 0, kind: input, shape index: {}]
  %s1 = inlined_call_operand.vmem [shape: f32[16,96], index: 1, kind: input, shape index: {}]
  %s2 = inlined_call_operand.vmem [shape: f32[1,96], index: 2, kind: input, shape index: {}]
  %s3 = inlined_call_operand.vmem [shape: f32[32,32], index: 3, kind: input, shape index: {}]
  %s4 = inlined_call_operand.vmem [shape: f32[32,32], index: 4, kind: input, shape index: {}]
  %s5 = inlined_call_operand.vmem [shape: f32[32,32], index: 5, kind: input, shape index: {}]
  %s6 = inlined_call_operand.vmem [shape: f32[1,32], index: 6, kind: input, shape index: {}]
  %s7 = inlined_call_operand.vmem [shape: f32[8,32,8], index: 7, kind: output, shape index: {}]
  %s8 = sld [smem:[#allocation0]]
  $region38: #{tpu_custom_call.1} parent=0
    _
  %s10 = ssub.s32 1, %s8
  %s11 = scalar_select 0, %s10, %s8
  // Predicated region
  $region2: #{tpu_custom_call.1} parent=0 // pred_check
    _
  $region3: #{tpu_custom_call.1} parent=0 // pred_check_branch
    %13 = sbr.rel (0) target = $region5
  $region4: #{tpu_custom_call.1} parent=0 // pred_region
    _
  $region5: #{tpu_custom_call.1} parent=0 // pred_fallthru
    _
  // Predicated region
  $region6: #{tpu_custom_call.1} parent=0 // pred_check
    _
  $region7: #{tpu_custom_call.1} parent=0 // pred_check_branch
    %15 = sbr.rel (0) target = $region9
  $region8: #{tpu_custom_call.1} parent=0 // pred_region
    _
  $region9: #{tpu_custom_call.1} parent=0 // pred_fallthru
    _
  // Predicated region
  $region10: #{tpu_custom_call.1} parent=0 // pred_check
    _
  $region11: #{tpu_custom_call.1} parent=0 // pred_check_branch
    %17 = sbr.rel (0) target = $region13
  $region12: #{tpu_custom_call.1} parent=0 // pred_region
    _
  $region13: #{tpu_custom_call.1} parent=0 // pred_fallthru
    _
  // Predicated region
  $region14: #{tpu_custom_call.1} parent=0 // pred_check
    _
  $region15: #{tpu_custom_call.1} parent=0 // pred_check_branch
    %19 = sbr.rel (0) target = $region17
  $region16: #{tpu_custom_call.1} parent=0 // pred_region
    _
  $region17: #{tpu_custom_call.1} parent=0 // pred_fallthru
    _
  // Predicated region
  $region18: #{tpu_custom_call.1} parent=0 // pred_check
    _
  $region19: #{tpu_custom_call.1} parent=0 // pred_check_branch
    %21 = sbr.rel (0) target = $region21
  $region20: #{tpu_custom_call.1} parent=0 // pred_region
    _
  $region21: #{tpu_custom_call.1} parent=0 // pred_fallthru
    _
  // Predicated region
  $region22: #{tpu_custom_call.1} parent=0 // pred_check
    _
  $region23: #{tpu_custom_call.1} parent=0 // pred_check_branch
    %23 = sbr.rel (0) target = $region25
  $region24: #{tpu_custom_call.1} parent=0 // pred_region
    _
  $region25: #{tpu_custom_call.1} parent=0 // pred_fallthru
    _
  // Predicated region
  $region26: #{tpu_custom_call.1} parent=0 // pred_check
    _
  $region27: #{tpu_custom_call.1} parent=0 // pred_check_branch
    %25 = sbr.rel (0) target = $region29
  $region28: #{tpu_custom_call.1} parent=0 // pred_region
    _
  $region29: #{tpu_custom_call.1} parent=0 // pred_fallthru
    _
  %v26 = vld [vmem:[%s1] sm:$0xff]
  %v27 = vld [vmem:[%s1 + $0x8] sm:$0xff]
  %v28 = vld [vmem:[%s2] sm:$0x1]
  %v29 = vld [vmem:[%s3] sm:$0xff]
  %v30 = vld [vmem:[%s3 + $0x8] sm:$0xff]
  %v31 = vld [vmem:[%s3 + $0x10] sm:$0xff]
  %v32 = vld [vmem:[%s3 + $0x18] sm:$0xff]
  %v33 = vld [vmem:[%s4] sm:$0xff]
  %v34 = vld [vmem:[%s4 + $0x8] sm:$0xff]
  %v35 = vld [vmem:[%s4 + $0x10] sm:$0xff]
  %v36 = vld [vmem:[%s4 + $0x18] sm:$0xff]
  %v37 = vld [vmem:[%s5] sm:$0xff]
  %v38 = vld [vmem:[%s5 + $0x8] sm:$0xff]
  %v39 = vld [vmem:[%s5 + $0x10] sm:$0xff]
  %v40 = vld [vmem:[%s5 + $0x18] sm:$0xff]
  %v41 = vld [vmem:[%s6] sm:$0x1]
  %v42 = vld [vmem:[%s0] sm:$0xff]
  %v43 = vld [vmem:[%s0 + $0x8] sm:$0xff]
  %v44 = vld [vmem:[%s0 + $0x10] sm:$0xff]
  %v45 = vld [vmem:[%s0 + $0x18] sm:$0xff]
  %v46 = vld [vmem:[%s0 + $0x20] sm:$0xff]
  %v47 = vld [vmem:[%s0 + $0x28] sm:$0xff]
  %v48 = vld [vmem:[%s0 + $0x30] sm:$0xff]
  %v49 = vld [vmem:[%s0 + $0x38] sm:$0xff]
  %v50 = vld [vmem:[%s0 + $0x40] sm:$0xff]
  %v51 = vld [vmem:[%s0 + $0x48] sm:$0xff]
  %v52 = vld [vmem:[%s0 + $0x50] sm:$0xff]
  %v53 = vld [vmem:[%s0 + $0x58] sm:$0xff]
  %v54 = vld [vmem:[%s0 + $0x60] sm:$0xff]
  %v55 = vld [vmem:[%s0 + $0x68] sm:$0xff]
  %v56 = vld [vmem:[%s0 + $0x70] sm:$0xff]
  %v57 = vld [vmem:[%s0 + $0x78] sm:$0xff]
  %58 = vxpose.xlu0.b32.start [1/16] %v42, 128
  %59 = vxpose.xlu0.b32.cont [2/16] %v43, 128
  %60 = vxpose.xlu0.b32.cont [3/16] 0.0, 128
  %61 = vxpose.xlu0.b32.cont [4/16] 0.0, 128
  %62 = vxpose.xlu0.b32.cont [5/16] 0.0, 128
  %63 = vxpose.xlu0.b32.cont [6/16] 0.0, 128
  %64 = vxpose.xlu0.b32.cont [7/16] 0.0, 128
  %65 = vxpose.xlu0.b32.cont [8/16] 0.0, 128
  %66 = vxpose.xlu0.b32.cont [9/16] 0.0, 128
  %67 = vxpose.xlu0.b32.cont [10/16] 0.0, 128
  %68 = vxpose.xlu0.b32.cont [11/16] 0.0, 128
  %69 = vxpose.xlu0.b32.cont [12/16] 0.0, 128
  %70 = vxpose.xlu0.b32.cont [13/16] 0.0, 128
  %71 = vxpose.xlu0.b32.cont [14/16] 0.0, 128
  %72 = vxpose.xlu0.b32.cont [15/16] 0.0, 128
  %73 = vxpose.xlu0.b32.end [16/16] 0.0, 128
  %v74 = vpop.trf.xlu0
  %v75 = vpop.trf.xlu0
  %v76 = vpop.trf.xlu0
  %v77 = vpop.trf.xlu0
  %v78 = vpop.trf.xlu0
  %v79 = vpop.trf.xlu0
  %v80 = vpop.trf.xlu0
  %v81 = vpop.trf.xlu0
  %v82 = vpop.trf.xlu0
  %v83 = vpop.trf.xlu0
  %v84 = vpop.trf.xlu0
  %v85 = vpop.trf.xlu0
  %v86 = vpop.trf.xlu0
  %v87 = vpop.trf.xlu0
  %v88 = vpop.trf.xlu0
  %v89 = vpop.trf.xlu0
  %90 = vxpose.xlu0.b32.start [1/16] %v44, 128
  %91 = vxpose.xlu0.b32.cont [2/16] %v45, 128
  %92 = vxpose.xlu0.b32.cont [3/16] 0.0, 128
  %93 = vxpose.xlu0.b32.cont [4/16] 0.0, 128
  %94 = vxpose.xlu0.b32.cont [5/16] 0.0, 128
  %95 = vxpose.xlu0.b32.cont [6/16] 0.0, 128
  %96 = vxpose.xlu0.b32.cont [7/16] 0.0, 128
  %97 = vxpose.xlu0.b32.cont [8/16] 0.0, 128
  %98 = vxpose.xlu0.b32.cont [9/16] 0.0, 128
  %99 = vxpose.xlu0.b32.cont [10/16] 0.0, 128
  %100 = vxpose.xlu0.b32.cont [11/16] 0.0, 128
  %101 = vxpose.xlu0.b32.cont [12/16] 0.0, 128
  %102 = vxpose.xlu0.b32.cont [13/16] 0.0, 128
  %103 = vxpose.xlu0.b32.cont [14/16] 0.0, 128
  %104 = vxpose.xlu0.b32.cont [15/16] 0.0, 128
  %105 = vxpose.xlu0.b32.end [16/16] 0.0, 128
  %v106 = vpop.trf.xlu0
  %v107 = vpop.trf.xlu0
  %v108 = vpop.trf.xlu0
  %v109 = vpop.trf.xlu0
  %v110 = vpop.trf.xlu0
  %v111 = vpop.trf.xlu0
  %v112 = vpop.trf.xlu0
  %v113 = vpop.trf.xlu0
  %v114 = vpop.trf.xlu0
  %v115 = vpop.trf.xlu0
  %v116 = vpop.trf.xlu0
  %v117 = vpop.trf.xlu0
  %v118 = vpop.trf.xlu0
  %v119 = vpop.trf.xlu0
  %v120 = vpop.trf.xlu0
  %v121 = vpop.trf.xlu0
  %122 = vxpose.xlu0.b32.start [1/16] %v46, 128
  %123 = vxpose.xlu0.b32.cont [2/16] %v47, 128
  %124 = vxpose.xlu0.b32.cont [3/16] 0.0, 128
  %125 = vxpose.xlu0.b32.cont [4/16] 0.0, 128
  %126 = vxpose.xlu0.b32.cont [5/16] 0.0, 128
  %127 = vxpose.xlu0.b32.cont [6/16] 0.0, 128
  %128 = vxpose.xlu0.b32.cont [7/16] 0.0, 128
  %129 = vxpose.xlu0.b32.cont [8/16] 0.0, 128
  %130 = vxpose.xlu0.b32.cont [9/16] 0.0, 128
  %131 = vxpose.xlu0.b32.cont [10/16] 0.0, 128
  %132 = vxpose.xlu0.b32.cont [11/16] 0.0, 128
  %133 = vxpose.xlu0.b32.cont [12/16] 0.0, 128
  %134 = vxpose.xlu0.b32.cont [13/16] 0.0, 128
  %135 = vxpose.xlu0.b32.cont [14/16] 0.0, 128
  %136 = vxpose.xlu0.b32.cont [15/16] 0.0, 128
  %137 = vxpose.xlu0.b32.end [16/16] 0.0, 128
  %v138 = vpop.trf.xlu0
  %v139 = vpop.trf.xlu0
  %v140 = vpop.trf.xlu0
  %v141 = vpop.trf.xlu0
  %v142 = vpop.trf.xlu0
  %v143 = vpop.trf.xlu0
  %v144 = vpop.trf.xlu0
  %v145 = vpop.trf.xlu0
  %v146 = vpop.trf.xlu0
  %v147 = vpop.trf.xlu0
  %v148 = vpop.trf.xlu0
  %v149 = vpop.trf.xlu0
  %v150 = vpop.trf.xlu0
  %v151 = vpop.trf.xlu0
  %v152 = vpop.trf.xlu0
  %v153 = vpop.trf.xlu0
  %154 = vxpose.xlu0.b32.start [1/16] %v48, 128
  %155 = vxpose.xlu0.b32.cont [2/16] %v49, 128
  %156 = vxpose.xlu0.b32.cont [3/16] 0.0, 128
  %157 = vxpose.xlu0.b32.cont [4/16] 0.0, 128
  %158 = vxpose.xlu0.b32.cont [5/16] 0.0, 128
  %159 = vxpose.xlu0.b32.cont [6/16] 0.0, 128
  %160 = vxpose.xlu0.b32.cont [7/16] 0.0, 128
  %161 = vxpose.xlu0.b32.cont [8/16] 0.0, 128
  %162 = vxpose.xlu0.b32.cont [9/16] 0.0, 128
  %163 = vxpose.xlu0.b32.cont [10/16] 0.0, 128
  %164 = vxpose.xlu0.b32.cont [11/16] 0.0, 128
  %165 = vxpose.xlu0.b32.cont [12/16] 0.0, 128
  %166 = vxpose.xlu0.b32.cont [13/16] 0.0, 128
  %167 = vxpose.xlu0.b32.cont [14/16] 0.0, 128
  %168 = vxpose.xlu0.b32.cont [15/16] 0.0, 128
  %169 = vxpose.xlu0.b32.end [16/16] 0.0, 128
  %v170 = vpop.trf.xlu0
  %v171 = vpop.trf.xlu0
  %v172 = vpop.trf.xlu0
  %v173 = vpop.trf.xlu0
  %v174 = vpop.trf.xlu0
  %v175 = vpop.trf.xlu0
  %v176 = vpop.trf.xlu0
  %v177 = vpop.trf.xlu0
  %v178 = vpop.trf.xlu0
  %v179 = vpop.trf.xlu0
  %v180 = vpop.trf.xlu0
  %v181 = vpop.trf.xlu0
  %v182 = vpop.trf.xlu0
  %v183 = vpop.trf.xlu0
  %v184 = vpop.trf.xlu0
  %v185 = vpop.trf.xlu0
  %186 = vxpose.xlu0.b32.start [1/16] %v50, 128
  %187 = vxpose.xlu0.b32.cont [2/16] %v51, 128
  %188 = vxpose.xlu0.b32.cont [3/16] 0.0, 128
  %189 = vxpose.xlu0.b32.cont [4/16] 0.0, 128
  %190 = vxpose.xlu0.b32.cont [5/16] 0.0, 128
  %191 = vxpose.xlu0.b32.cont [6/16] 0.0, 128
  %192 = vxpose.xlu0.b32.cont [7/16] 0.0, 128
  %193 = vxpose.xlu0.b32.cont [8/16] 0.0, 128
  %194 = vxpose.xlu0.b32.cont [9/16] 0.0, 128
  %195 = vxpose.xlu0.b32.cont [10/16] 0.0, 128
  %196 = vxpose.xlu0.b32.cont [11/16] 0.0, 128
  %197 = vxpose.xlu0.b32.cont [12/16] 0.0, 128
  %198 = vxpose.xlu0.b32.cont [13/16] 0.0, 128
  %199 = vxpose.xlu0.b32.cont [14/16] 0.0, 128
  %200 = vxpose.xlu0.b32.cont [15/16] 0.0, 128
  %201 = vxpose.xlu0.b32.end [16/16] 0.0, 128
  %v202 = vpop.trf.xlu0
  %v203 = vpop.trf.xlu0
  %v204 = vpop.trf.xlu0
  %v205 = vpop.trf.xlu0
  %v206 = vpop.trf.xlu0
  %v207 = vpop.trf.xlu0
  %v208 = vpop.trf.xlu0
  %v209 = vpop.trf.xlu0
  %v210 = vpop.trf.xlu0
  %v211 = vpop.trf.xlu0
  %v212 = vpop.trf.xlu0
  %v213 = vpop.trf.xlu0
  %v214 = vpop.trf.xlu0
  %v215 = vpop.trf.xlu0
  %v216 = vpop.trf.xlu0
  %v217 = vpop.trf.xlu0
  %218 = vxpose.xlu0.b32.start [1/16] %v52, 128
  %219 = vxpose.xlu0.b32.cont [2/16] %v53, 128
  %220 = vxpose.xlu0.b32.cont [3/16] 0.0, 128
  %221 = vxpose.xlu0.b32.cont [4/16] 0.0, 128
  %222 = vxpose.xlu0.b32.cont [5/16] 0.0, 128
  %223 = vxpose.xlu0.b32.cont [6/16] 0.0, 128
  %224 = vxpose.xlu0.b32.cont [7/16] 0.0, 128
  %225 = vxpose.xlu0.b32.cont [8/16] 0.0, 128
  %226 = vxpose.xlu0.b32.cont [9/16] 0.0, 128
  %227 = vxpose.xlu0.b32.cont [10/16] 0.0, 128
  %228 = vxpose.xlu0.b32.cont [11/16] 0.0, 128
  %229 = vxpose.xlu0.b32.cont [12/16] 0.0, 128
  %230 = vxpose.xlu0.b32.cont [13/16] 0.0, 128
  %231 = vxpose.xlu0.b32.cont [14/16] 0.0, 128
  %232 = vxpose.xlu0.b32.cont [15/16] 0.0, 128
  %233 = vxpose.xlu0.b32.end [16/16] 0.0, 128
  %v234 = vpop.trf.xlu0
  %v235 = vpop.trf.xlu0
  %v236 = vpop.trf.xlu0
  %v237 = vpop.trf.xlu0
  %v238 = vpop.trf.xlu0
  %v239 = vpop.trf.xlu0
  %v240 = vpop.trf.xlu0
  %v241 = vpop.trf.xlu0
  %v242 = vpop.trf.xlu0
  %v243 = vpop.trf.xlu0
  %v244 = vpop.trf.xlu0
  %v245 = vpop.trf.xlu0
  %v246 = vpop.trf.xlu0
  %v247 = vpop.trf.xlu0
  %v248 = vpop.trf.xlu0
  %v249 = vpop.trf.xlu0
  %250 = vxpose.xlu0.b32.start [1/16] %v54, 128
  %251 = vxpose.xlu0.b32.cont [2/16] %v55, 128
  %252 = vxpose.xlu0.b32.cont [3/16] 0.0, 128
  %253 = vxpose.xlu0.b32.cont [4/16] 0.0, 128
  %254 = vxpose.xlu0.b32.cont [5/16] 0.0, 128
  %255 = vxpose.xlu0.b32.cont [6/16] 0.0, 128
  %256 = vxpose.xlu0.b32.cont [7/16] 0.0, 128
  %257 = vxpose.xlu0.b32.cont [8/16] 0.0, 128
  %258 = vxpose.xlu0.b32.cont [9/16] 0.0, 128
  %259 = vxpose.xlu0.b32.cont [10/16] 0.0, 128
  %260 = vxpose.xlu0.b32.cont [11/16] 0.0, 128
  %261 = vxpose.xlu0.b32.cont [12/16] 0.0, 128
  %262 = vxpose.xlu0.b32.cont [13/16] 0.0, 128
  %263 = vxpose.xlu0.b32.cont [14/16] 0.0, 128
  %264 = vxpose.xlu0.b32.cont [15/16] 0.0, 128
  %265 = vxpose.xlu0.b32.end [16/16] 0.0, 128
  %v266 = vpop.trf.xlu0
  %v267 = vpop.trf.xlu0
  %v268 = vpop.trf.xlu0
  %v269 = vpop.trf.xlu0
  %v270 = vpop.trf.xlu0
  %v271 = vpop.trf.xlu0
  %v272 = vpop.trf.xlu0
  %v273 = vpop.trf.xlu0
  %v274 = vpop.trf.xlu0
  %v275 = vpop.trf.xlu0
  %v276 = vpop.trf.xlu0
  %v277 = vpop.trf.xlu0
  %v278 = vpop.trf.xlu0
  %v279 = vpop.trf.xlu0
  %v280 = vpop.trf.xlu0
  %v281 = vpop.trf.xlu0
  %282 = vxpose.xlu0.b32.start [1/16] %v56, 128
  %283 = vxpose.xlu0.b32.cont [2/16] %v57, 128
  %284 = vxpose.xlu0.b32.cont [3/16] 0.0, 128
  %285 = vxpose.xlu0.b32.cont [4/16] 0.0, 128
  %286 = vxpose.xlu0.b32.cont [5/16] 0.0, 128
  %287 = vxpose.xlu0.b32.cont [6/16] 0.0, 128
  %288 = vxpose.xlu0.b32.cont [7/16] 0.0, 128
  %289 = vxpose.xlu0.b32.cont [8/16] 0.0, 128
  %290 = vxpose.xlu0.b32.cont [9/16] 0.0, 128
  %291 = vxpose.xlu0.b32.cont [10/16] 0.0, 128
  %292 = vxpose.xlu0.b32.cont [11/16] 0.0, 128
  %293 = vxpose.xlu0.b32.cont [12/16] 0.0, 128
  %294 = vxpose.xlu0.b32.cont [13/16] 0.0, 128
  %295 = vxpose.xlu0.b32.cont [14/16] 0.0, 128
  %296 = vxpose.xlu0.b32.cont [15/16] 0.0, 128
  %297 = vxpose.xlu0.b32.end [16/16] 0.0, 128
  %v298 = vpop.trf.xlu0
  %v299 = vpop.trf.xlu0
  %v300 = vpop.trf.xlu0
  %v301 = vpop.trf.xlu0
  %v302 = vpop.trf.xlu0
  %v303 = vpop.trf.xlu0
  %v304 = vpop.trf.xlu0
  %v305 = vpop.trf.xlu0
  %v306 = vpop.trf.xlu0
  %v307 = vpop.trf.xlu0
  %v308 = vpop.trf.xlu0
  %v309 = vpop.trf.xlu0
  %v310 = vpop.trf.xlu0
  %v311 = vpop.trf.xlu0
  %v312 = vpop.trf.xlu0
  %v313 = vpop.trf.xlu0
  %v315 = vlaneseq
  %v316 = vshrl.u32 %v315, 7
  %v317 = vsub.s32 0, %v316
  %v318 = vrot.slane %v28, %v317
  %vm320 = vcmask 130048
  %v322 = vsel %vm320, %v74, 0
  %v325 = vsel %vm320, %v106, 0
  %v328 = vsel %vm320, %v138, 0
  %v331 = vsel %vm320, %v170, 0
  %v334 = vsel %vm320, %v202, 0
  %v337 = vsel %vm320, %v234, 0
  %v340 = vsel %vm320, %v266, 0
  %v343 = vsel %vm320, %v298, 0
  %345 = vmatprep.subr.mxu0 0.0
  %346 = vmatpush1.msra.mxu0 %v26
  %347 = vmatprep.subr.mxu0 0.0
  %348 = vmatpush1.msra.mxu0 %v27
  %349 = vmatprep.subr.mxu0 0.0
  %350 = vmatpush1.msra.mxu0 0.0
  %351 = vmatprep.subr.mxu0 0.0
  %352 = vmatpush1.msra.mxu0 0.0
  %353 = vmatprep.subr.mxu0 0.0
  %354 = vmatpush1.msra.mxu0 0.0
  %355 = vmatprep.subr.mxu0 0.0
  %356 = vmatpush1.msra.mxu0 0.0
  %357 = vmatprep.subr.mxu0 0.0
  %358 = vmatpush1.msra.mxu0 0.0
  %359 = vmatprep.subr.mxu0 0.0
  %360 = vmatpush1.msra.mxu0 0.0
  %361 = vmatprep.subr.mxu0 0.0
  %362 = vmatpush1.msra.mxu0 0.0
  %363 = vmatprep.subr.mxu0 0.0
  %364 = vmatpush1.msra.mxu0 0.0
  %365 = vmatprep.subr.mxu0 0.0
  %366 = vmatpush1.msra.mxu0 0.0
  %367 = vmatprep.subr.mxu0 0.0
  %368 = vmatpush1.msra.mxu0 0.0
  %369 = vmatprep.subr.mxu0 0.0
  %370 = vmatpush1.msra.mxu0 0.0
  %371 = vmatprep.subr.mxu0 0.0
  %372 = vmatpush1.msra.mxu0 0.0
  %373 = vmatprep.subr.mxu0 0.0
  %374 = vmatpush1.msra.mxu0 0.0
  %375 = vmatprep.subr.mxu0 0.0
  %376 = vmatpush1.msra.mxu0 0.0
  %377 = vmatprep.subr.mxu0 0.0
  %378 = vmatpush1.msra.mxu0 0.0
  %379 = vmatprep.subr.mxu0 0.0
  %380 = vmatpush1.msra.mxu0 0.0
  %381 = vmatprep.subr.mxu0 0.0
  %382 = vmatpush1.msra.mxu0 0.0
  %383 = vmatprep.subr.mxu0 0.0
  %384 = vmatpush1.msra.mxu0 0.0
  %385 = vmatprep.subr.mxu0 0.0
  %386 = vmatpush1.msra.mxu0 0.0
  %387 = vmatprep.subr.mxu0 0.0
  %388 = vmatpush1.msra.mxu0 0.0
  %389 = vmatprep.subr.mxu0 0.0
  %390 = vmatpush1.msra.mxu0 0.0
  %391 = vmatprep.subr.mxu0 0.0
  %392 = vmatpush1.msra.mxu0 0.0
  %393 = vmatprep.subr.mxu0 0.0
  %394 = vmatpush1.msra.mxu0 0.0
  %395 = vmatprep.subr.mxu0 0.0
  %396 = vmatpush1.msra.mxu0 0.0
  %397 = vmatprep.subr.mxu0 0.0
  %398 = vmatpush1.msra.mxu0 0.0
  %399 = vmatprep.subr.mxu0 0.0
  %400 = vmatpush1.msra.mxu0 0.0
  %401 = vmatprep.subr.mxu0 0.0
  %402 = vmatpush1.msra.mxu0 0.0
  %403 = vmatprep.subr.mxu0 0.0
  %404 = vmatpush1.msra.mxu0 0.0
  %405 = vmatprep.subr.mxu0 0.0
  %406 = vmatpush1.msra.mxu0 0.0
  %407 = vmatprep.subr.mxu0 0.0
  %408 = vmatpush1.msra.mxu0 0.0
  %409 = vmatprep.mubr.f32.mxu0 0.0
  %410 = vmatmul.mubr.f32.gmra.mrb[0].mxu0 %v322
  %v411 = vpop.f32.mrb[0].mxu0
  %v412 = vadd.f32 %v318, %v411
  %v413 = vpop.f32.mrb[0].mxu0
  %414 = vmatprep.mubr.f32.mxu0 0.0
  %415 = vmatmul.mubr.f32.gmra.mrb[0].mxu0 %v325
  %v416 = vpop.f32.mrb[0].mxu0
  %v417 = vadd.f32 %v318, %v416
  %v418 = vpop.f32.mrb[0].mxu0
  %419 = vmatprep.mubr.f32.mxu0 0.0
  %420 = vmatmul.mubr.f32.gmra.mrb[0].mxu0 %v328
  %v421 = vpop.f32.mrb[0].mxu0
  %v422 = vadd.f32 %v318, %v421
  %v423 = vpop.f32.mrb[0].mxu0
  %424 = vmatprep.mubr.f32.mxu0 0.0
  %425 = vmatmul.mubr.f32.gmra.mrb[0].mxu0 %v331
  %v426 = vpop.f32.mrb[0].mxu0
  %v427 = vadd.f32 %v318, %v426
  %v428 = vpop.f32.mrb[0].mxu0
  %429 = vmatprep.mubr.f32.mxu0 0.0
  %430 = vmatmul.mubr.f32.gmra.mrb[0].mxu0 %v334
  %v431 = vpop.f32.mrb[0].mxu0
  %v432 = vadd.f32 %v318, %v431
  %v433 = vpop.f32.mrb[0].mxu0
  %434 = vmatprep.mubr.f32.mxu0 0.0
  %435 = vmatmul.mubr.f32.gmra.mrb[0].mxu0 %v337
  %v436 = vpop.f32.mrb[0].mxu0
  %v437 = vadd.f32 %v318, %v436
  %v438 = vpop.f32.mrb[0].mxu0
  %439 = vmatprep.mubr.f32.mxu0 0.0
  %440 = vmatmul.mubr.f32.gmra.mrb[0].mxu0 %v340
  %v441 = vpop.f32.mrb[0].mxu0
  %v442 = vadd.f32 %v318, %v441
  %v443 = vpop.f32.mrb[0].mxu0
  %444 = vmatprep.mubr.f32.mxu0 0.0
  %445 = vmatmul.mubr.f32.gmra.mrb[0].mxu0 %v343
  %v446 = vpop.f32.mrb[0].mxu0
  %v447 = vadd.f32 %v318, %v446
  %v448 = vpop.f32.mrb[0].mxu0
  %449 = vdwg.mxu0
  %vm450 = vcmask 785408
  %451 = vst.msk [vmem:[#allocation2] sm:$0xff] %vm450, %v412
  %452 = vst.msk [vmem:[#allocation2 + $0x8] sm:$0xff] %vm450, %v417
  %453 = vst.msk [vmem:[#allocation2 + $0x10] sm:$0xff] %vm450, %v422
  %454 = vst.msk [vmem:[#allocation2 + $0x18] sm:$0xff] %vm450, %v427
  %455 = vst.msk [vmem:[#allocation2 + $0x20] sm:$0xff] %vm450, %v432
  %456 = vst.msk [vmem:[#allocation2 + $0x28] sm:$0xff] %vm450, %v437
  %457 = vst.msk [vmem:[#allocation2 + $0x30] sm:$0xff] %vm450, %v442
  %458 = vst.msk [vmem:[#allocation2 + $0x38] sm:$0xff] %vm450, %v447
  %v459 = vld [vmem:[#allocation2] sm:$0xff]
  %v460 = vld [vmem:[#allocation2 + $0x8] sm:$0xff]
  %v461 = vld [vmem:[#allocation2 + $0x10] sm:$0xff]
  %v462 = vld [vmem:[#allocation2 + $0x18] sm:$0xff]
  %v463 = vld [vmem:[#allocation2 + $0x20] sm:$0xff]
  %v464 = vld [vmem:[#allocation2 + $0x28] sm:$0xff]
  %v465 = vld [vmem:[#allocation2 + $0x30] sm:$0xff]
  %v466 = vld [vmem:[#allocation2 + $0x38] sm:$0xff]
  %471 = vrot.lane.b32.xlu0 %v29, 32
  %v472 = vpop.permute.xlu0 %471
  %473 = vrot.lane.b32.xlu0 %v30, 32
  %v474 = vpop.permute.xlu0 %473
  %475 = vrot.lane.b32.xlu0 %v31, 32
  %v476 = vpop.permute.xlu0 %475
  %477 = vrot.lane.b32.xlu0 %v32, 32
  %v478 = vpop.permute.xlu0 %477
  %v483 = vmul.f32 %v459, %v472
  %v484 = vmul.f32 %v459, %v474
  %v485 = vmul.f32 %v459, %v476
  %v486 = vmul.f32 %v459, %v478
  %v487 = vmul.f32 %v460, %v472
  %v488 = vmul.f32 %v460, %v474
  %v489 = vmul.f32 %v460, %v476
  %v490 = vmul.f32 %v460, %v478
  %v491 = vmul.f32 %v461, %v472
  %v492 = vmul.f32 %v461, %v474
  %v493 = vmul.f32 %v461, %v476
  %v494 = vmul.f32 %v461, %v478
  %v495 = vmul.f32 %v462, %v472
  %v496 = vmul.f32 %v462, %v474
  %v497 = vmul.f32 %v462, %v476
  %v498 = vmul.f32 %v462, %v478
  %v499 = vmul.f32 %v463, %v472
  %v500 = vmul.f32 %v463, %v474
  %v501 = vmul.f32 %v463, %v476
  %v502 = vmul.f32 %v463, %v478
  %v503 = vmul.f32 %v464, %v472
  %v504 = vmul.f32 %v464, %v474
  %v505 = vmul.f32 %v464, %v476
  %v506 = vmul.f32 %v464, %v478
  %v507 = vmul.f32 %v465, %v472
  %v508 = vmul.f32 %v465, %v474
  %v509 = vmul.f32 %v465, %v476
  %v510 = vmul.f32 %v465, %v478
  %v511 = vmul.f32 %v466, %v472
  %v512 = vmul.f32 %v466, %v474
  %v513 = vmul.f32 %v466, %v476
  %v514 = vmul.f32 %v466, %v478
  %515 = vrot.lane.b32.xlu0 %v29, 64
  %v516 = vpop.permute.xlu0 %515
  %517 = vrot.lane.b32.xlu0 %v30, 64
  %v518 = vpop.permute.xlu0 %517
  %519 = vrot.lane.b32.xlu0 %v31, 64
  %v520 = vpop.permute.xlu0 %519
  %521 = vrot.lane.b32.xlu0 %v32, 64
  %v522 = vpop.permute.xlu0 %521
  %v527 = vmul.f32 %v459, %v516
  %v528 = vmul.f32 %v459, %v518
  %v529 = vmul.f32 %v459, %v520
  %v530 = vmul.f32 %v459, %v522
  %v531 = vmul.f32 %v460, %v516
  %v532 = vmul.f32 %v460, %v518
  %v533 = vmul.f32 %v460, %v520
  %v534 = vmul.f32 %v460, %v522
  %v535 = vmul.f32 %v461, %v516
  %v536 = vmul.f32 %v461, %v518
  %v537 = vmul.f32 %v461, %v520
  %v538 = vmul.f32 %v461, %v522
  %v539 = vmul.f32 %v462, %v516
  %v540 = vmul.f32 %v462, %v518
  %v541 = vmul.f32 %v462, %v520
  %v542 = vmul.f32 %v462, %v522
  %v543 = vmul.f32 %v463, %v516
  %v544 = vmul.f32 %v463, %v518
  %v545 = vmul.f32 %v463, %v520
  %v546 = vmul.f32 %v463, %v522
  %v547 = vmul.f32 %v464, %v516
  %v548 = vmul.f32 %v464, %v518
  %v549 = vmul.f32 %v464, %v520
  %v550 = vmul.f32 %v464, %v522
  %v551 = vmul.f32 %v465, %v516
  %v552 = vmul.f32 %v465, %v518
  %v553 = vmul.f32 %v465, %v520
  %v554 = vmul.f32 %v465, %v522
  %v555 = vmul.f32 %v466, %v516
  %v556 = vmul.f32 %v466, %v518
  %v557 = vmul.f32 %v466, %v520
  %v558 = vmul.f32 %v466, %v522
  %563 = vrot.lane.b32.xlu0 %v483, 96
  %v564 = vpop.permute.xlu0 %563
  %565 = vrot.lane.b32.xlu0 %v484, 96
  %v566 = vpop.permute.xlu0 %565
  %567 = vrot.lane.b32.xlu0 %v485, 96
  %v568 = vpop.permute.xlu0 %567
  %569 = vrot.lane.b32.xlu0 %v486, 96
  %v570 = vpop.permute.xlu0 %569
  %vm571 = vcmask 261120
  %v573 = vsel %vm571, %v459, 0
  %v575 = vsel %vm571, %v564, 0
  %v577 = vsel %vm571, %v566, 0
  %v579 = vsel %vm571, %v568, 0
  %v581 = vsel %vm571, %v570, 0
  %583 = vmatprep.subr.mxu0 0.0
  %584 = vmatpush1.xpose.msra.mxu0 %v575
  %585 = vmatprep.subr.mxu0 0.0
  %586 = vmatpush1.xpose.msra.mxu0 %v577
  %587 = vmatprep.subr.mxu0 0.0
  %588 = vmatpush1.xpose.msra.mxu0 %v579
  %589 = vmatprep.subr.mxu0 0.0
  %590 = vmatpush1.xpose.msra.mxu0 %v581
  %591 = vmatprep.subr.mxu0 0.0
  %592 = vmatpush1.xpose.msra.mxu0 0.0
  %593 = vmatprep.subr.mxu0 0.0
  %594 = vmatpush1.xpose.msra.mxu0 0.0
  %595 = vmatprep.subr.mxu0 0.0
  %596 = vmatpush1.xpose.msra.mxu0 0.0
  %597 = vmatprep.subr.mxu0 0.0
  %598 = vmatpush1.xpose.msra.mxu0 0.0
  %599 = vmatprep.subr.mxu0 0.0
  %600 = vmatpush1.xpose.msra.mxu0 0.0
  %601 = vmatprep.subr.mxu0 0.0
  %602 = vmatpush1.xpose.msra.mxu0 0.0
  %603 = vmatprep.subr.mxu0 0.0
  %604 = vmatpush1.xpose.msra.mxu0 0.0
  %605 = vmatprep.subr.mxu0 0.0
  %606 = vmatpush1.xpose.msra.mxu0 0.0
  %607 = vmatprep.subr.mxu0 0.0
  %608 = vmatpush1.xpose.msra.mxu0 0.0
  %609 = vmatprep.subr.mxu0 0.0
  %610 = vmatpush1.xpose.msra.mxu0 0.0
  %611 = vmatprep.subr.mxu0 0.0
  %612 = vmatpush1.xpose.msra.mxu0 0.0
  %613 = vmatprep.subr.mxu0 0.0
  %614 = vmatpush1.xpose.msra.mxu0 0.0
  %615 = vmatprep.subr.mxu0 0.0
  %616 = vmatpush1.xpose.msra.mxu0 0.0
  %617 = vmatprep.subr.mxu0 0.0
  %618 = vmatpush1.xpose.msra.mxu0 0.0
  %619 = vmatprep.subr.mxu0 0.0
  %620 = vmatpush1.xpose.msra.mxu0 0.0
  %621 = vmatprep.subr.mxu0 0.0
  %622 = vmatpush1.xpose.msra.mxu0 0.0
  %623 = vmatprep.subr.mxu0 0.0
  %624 = vmatpush1.xpose.msra.mxu0 0.0
  %625 = vmatprep.subr.mxu0 0.0
  %626 = vmatpush1.xpose.msra.mxu0 0.0
  %627 = vmatprep.subr.mxu0 0.0
  %628 = vmatpush1.xpose.msra.mxu0 0.0
  %629 = vmatprep.subr.mxu0 0.0
  %630 = vmatpush1.xpose.msra.mxu0 0.0
  %631 = vmatprep.subr.mxu0 0.0
  %632 = vmatpush1.xpose.msra.mxu0 0.0
  %633 = vmatprep.subr.mxu0 0.0
  %634 = vmatpush1.xpose.msra.mxu0 0.0
  %635 = vmatprep.subr.mxu0 0.0
  %636 = vmatpush1.xpose.msra.mxu0 0.0
  %637 = vmatprep.subr.mxu0 0.0
  %638 = vmatpush1.xpose.msra.mxu0 0.0
  %639 = vmatprep.subr.mxu0 0.0
  %640 = vmatpush1.xpose.msra.mxu0 0.0
  %641 = vmatprep.subr.mxu0 0.0
  %642 = vmatpush1.xpose.msra.mxu0 0.0
  %643 = vmatprep.subr.mxu0 0.0
  %644 = vmatpush1.xpose.msra.mxu0 0.0
  %645 = vmatprep.subr.mxu0 0.0
  %646 = vmatpush1.xpose.msra.mxu0 0.0
  %647 = vmatprep.mubr.f32.mxu0 0.0
  %648 = vmatmul.mubr.f32.gmra.mrb[0].mxu0 %v573
  %v649 = vpop.f32.mrb[0].mxu0
  %v650 = vadd.f32 0.0, %v649
  %v651 = vpop.f32.mrb[0].mxu0
  %652 = vdwg.mxu0
  %657 = vrot.lane.b32.xlu0 %v487, 96
  %v658 = vpop.permute.xlu0 %657
  %659 = vrot.lane.b32.xlu0 %v488, 96
  %v660 = vpop.permute.xlu0 %659
  %661 = vrot.lane.b32.xlu0 %v489, 96
  %v662 = vpop.permute.xlu0 %661
  %663 = vrot.lane.b32.xlu0 %v490, 96
  %v664 = vpop.permute.xlu0 %663
  %v666 = vsel %vm571, %v460, 0
  %v668 = vsel %vm571, %v658, 0
  %v670 = vsel %vm571, %v660, 0
  %v672 = vsel %vm571, %v662, 0
  %v674 = vsel %vm571, %v664, 0
  %676 = vmatprep.subr.mxu0 0.0
  %677 = vmatpush1.xpose.msra.mxu0 %v668
  %678 = vmatprep.subr.mxu0 0.0
  %679 = vmatpush1.xpose.msra.mxu0 %v670
  %680 = vmatprep.subr.mxu0 0.0
  %681 = vmatpush1.xpose.msra.mxu0 %v672
  %682 = vmatprep.subr.mxu0 0.0
  %683 = vmatpush1.xpose.msra.mxu0 %v674
  %684 = vmatprep.subr.mxu0 0.0
  %685 = vmatpush1.xpose.msra.mxu0 0.0
  %686 = vmatprep.subr.mxu0 0.0
  %687 = vmatpush1.xpose.msra.mxu0 0.0
  %688 = vmatprep.subr.mxu0 0.0
  %689 = vmatpush1.xpose.msra.mxu0 0.0
  %690 = vmatprep.subr.mxu0 0.0
  %691 = vmatpush1.xpose.msra.mxu0 0.0
  %692 = vmatprep.subr.mxu0 0.0
  %693 = vmatpush1.xpose.msra.mxu0 0.0
  %694 = vmatprep.subr.mxu0 0.0
  %695 = vmatpush1.xpose.msra.mxu0 0.0
  %696 = vmatprep.subr.mxu0 0.0
  %697 = vmatpush1.xpose.msra.mxu0 0.0
  %698 = vmatprep.subr.mxu0 0.0
  %699 = vmatpush1.xpose.msra.mxu0 0.0
  %700 = vmatprep.subr.mxu0 0.0
  %701 = vmatpush1.xpose.msra.mxu0 0.0
  %702 = vmatprep.subr.mxu0 0.0
  %703 = vmatpush1.xpose.msra.mxu0 0.0
  %704 = vmatprep.subr.mxu0 0.0
  %705 = vmatpush1.xpose.msra.mxu0 0.0
  %706 = vmatprep.subr.mxu0 0.0
  %707 = vmatpush1.xpose.msra.mxu0 0.0
  %708 = vmatprep.subr.mxu0 0.0
  %709 = vmatpush1.xpose.msra.mxu0 0.0
  %710 = vmatprep.subr.mxu0 0.0
  %711 = vmatpush1.xpose.msra.mxu0 0.0
  %712 = vmatprep.subr.mxu0 0.0
  %713 = vmatpush1.xpose.msra.mxu0 0.0
  %714 = vmatprep.subr.mxu0 0.0
  %715 = vmatpush1.xpose.msra.mxu0 0.0
  %716 = vmatprep.subr.mxu0 0.0
  %717 = vmatpush1.xpose.msra.mxu0 0.0
  %718 = vmatprep.subr.mxu0 0.0
  %719 = vmatpush1.xpose.msra.mxu0 0.0
  %720 = vmatprep.subr.mxu0 0.0
  %721 = vmatpush1.xpose.msra.mxu0 0.0
  %722 = vmatprep.subr.mxu0 0.0
  %723 = vmatpush1.xpose.msra.mxu0 0.0
  %724 = vmatprep.subr.mxu0 0.0
  %725 = vmatpush1.xpose.msra.mxu0 0.0
  %726 = vmatprep.subr.mxu0 0.0
  %727 = vmatpush1.xpose.msra.mxu0 0.0
  %728 = vmatprep.subr.mxu0 0.0
  %729 = vmatpush1.xpose.msra.mxu0 0.0
  %730 = vmatprep.subr.mxu0 0.0
  %731 = vmatpush1.xpose.msra.mxu0 0.0
  %732 = vmatprep.subr.mxu0 0.0
  %733 = vmatpush1.xpose.msra.mxu0 0.0
  %734 = vmatprep.subr.mxu0 0.0
  %735 = vmatpush1.xpose.msra.mxu0 0.0
  %736 = vmatprep.subr.mxu0 0.0
  %737 = vmatpush1.xpose.msra.mxu0 0.0
  %738 = vmatprep.subr.mxu0 0.0
  %739 = vmatpush1.xpose.msra.mxu0 0.0
  %740 = vmatprep.mubr.f32.mxu0 0.0
  %741 = vmatmul.mubr.f32.gmra.mrb[0].mxu0 %v666
  %v742 = vpop.f32.mrb[0].mxu0
  %v743 = vadd.f32 0.0, %v742
  %v744 = vpop.f32.mrb[0].mxu0
  %745 = vdwg.mxu0
  %750 = vrot.lane.b32.xlu0 %v491, 96
  %v751 = vpop.permute.xlu0 %750
  %752 = vrot.lane.b32.xlu0 %v492, 96
  %v753 = vpop.permute.xlu0 %752
  %754 = vrot.lane.b32.xlu0 %v493, 96
  %v755 = vpop.permute.xlu0 %754
  %756 = vrot.lane.b32.xlu0 %v494, 96
  %v757 = vpop.permute.xlu0 %756
  %v759 = vsel %vm571, %v461, 0
  %v761 = vsel %vm571, %v751, 0
  %v763 = vsel %vm571, %v753, 0
  %v765 = vsel %vm571, %v755, 0
  %v767 = vsel %vm571, %v757, 0
  %769 = vmatprep.subr.mxu0 0.0
  %770 = vmatpush1.xpose.msra.mxu0 %v761
  %771 = vmatprep.subr.mxu0 0.0
  %772 = vmatpush1.xpose.msra.mxu0 %v763
  %773 = vmatprep.subr.mxu0 0.0
  %774 = vmatpush1.xpose.msra.mxu0 %v765
  %775 = vmatprep.subr.mxu0 0.0
  %776 = vmatpush1.xpose.msra.mxu0 %v767
  %777 = vmatprep.subr.mxu0 0.0
  %778 = vmatpush1.xpose.msra.mxu0 0.0
  %779 = vmatprep.subr.mxu0 0.0
  %780 = vmatpush1.xpose.msra.mxu0 0.0
  %781 = vmatprep.subr.mxu0 0.0
  %782 = vmatpush1.xpose.msra.mxu0 0.0
  %783 = vmatprep.subr.mxu0 0.0
  %784 = vmatpush1.xpose.msra.mxu0 0.0
  %785 = vmatprep.subr.mxu0 0.0
  %786 = vmatpush1.xpose.msra.mxu0 0.0
  %787 = vmatprep.subr.mxu0 0.0
  %788 = vmatpush1.xpose.msra.mxu0 0.0
  %789 = vmatprep.subr.mxu0 0.0
  %790 = vmatpush1.xpose.msra.mxu0 0.0
  %791 = vmatprep.subr.mxu0 0.0
  %792 = vmatpush1.xpose.msra.mxu0 0.0
  %793 = vmatprep.subr.mxu0 0.0
  %794 = vmatpush1.xpose.msra.mxu0 0.0
  %795 = vmatprep.subr.mxu0 0.0
  %796 = vmatpush1.xpose.msra.mxu0 0.0
  %797 = vmatprep.subr.mxu0 0.0
  %798 = vmatpush1.xpose.msra.mxu0 0.0
  %799 = vmatprep.subr.mxu0 0.0
  %800 = vmatpush1.xpose.msra.mxu0 0.0
  %801 = vmatprep.subr.mxu0 0.0
  %802 = vmatpush1.xpose.msra.mxu0 0.0
  %803 = vmatprep.subr.mxu0 0.0
  %804 = vmatpush1.xpose.msra.mxu0 0.0
  %805 = vmatprep.subr.mxu0 0.0
  %806 = vmatpush1.xpose.msra.mxu0 0.0
  %807 = vmatprep.subr.mxu0 0.0
  %808 = vmatpush1.xpose.msra.mxu0 0.0
  %809 = vmatprep.subr.mxu0 0.0
  %810 = vmatpush1.xpose.msra.mxu0 0.0
  %811 = vmatprep.subr.mxu0 0.0
  %812 = vmatpush1.xpose.msra.mxu0 0.0
  %813 = vmatprep.subr.mxu0 0.0
  %814 = vmatpush1.xpose.msra.mxu0 0.0
  %815 = vmatprep.subr.mxu0 0.0
  %816 = vmatpush1.xpose.msra.mxu0 0.0
  %817 = vmatprep.subr.mxu0 0.0
  %818 = vmatpush1.xpose.msra.mxu0 0.0
  %819 = vmatprep.subr.mxu0 0.0
  %820 = vmatpush1.xpose.msra.mxu0 0.0
  %821 = vmatprep.subr.mxu0 0.0
  %822 = vmatpush1.xpose.msra.mxu0 0.0
  %823 = vmatprep.subr.mxu0 0.0
  %824 = vmatpush1.xpose.msra.mxu0 0.0
  %825 = vmatprep.subr.mxu0 0.0
  %826 = vmatpush1.xpose.msra.mxu0 0.0
  %827 = vmatprep.subr.mxu0 0.0
  %828 = vmatpush1.xpose.msra.mxu0 0.0
  %829 = vmatprep.subr.mxu0 0.0
  %830 = vmatpush1.xpose.msra.mxu0 0.0
  %831 = vmatprep.subr.mxu0 0.0
  %832 = vmatpush1.xpose.msra.mxu0 0.0
  %833 = vmatprep.mubr.f32.mxu0 0.0
  %834 = vmatmul.mubr.f32.gmra.mrb[0].mxu0 %v759
  %v835 = vpop.f32.mrb[0].mxu0
  %v836 = vadd.f32 0.0, %v835
  %v837 = vpop.f32.mrb[0].mxu0
  %838 = vdwg.mxu0
  %843 = vrot.lane.b32.xlu0 %v495, 96
  %v844 = vpop.permute.xlu0 %843
  %845 = vrot.lane.b32.xlu0 %v496, 96
  %v846 = vpop.permute.xlu0 %845
  %847 = vrot.lane.b32.xlu0 %v497, 96
  %v848 = vpop.permute.xlu0 %847
  %849 = vrot.lane.b32.xlu0 %v498, 96
  %v850 = vpop.permute.xlu0 %849
  %v852 = vsel %vm571, %v462, 0
  %v854 = vsel %vm571, %v844, 0
  %v856 = vsel %vm571, %v846, 0
  %v858 = vsel %vm571, %v848, 0
  %v860 = vsel %vm571, %v850, 0
  %862 = vmatprep.subr.mxu0 0.0
  %863 = vmatpush1.xpose.msra.mxu0 %v854
  %864 = vmatprep.subr.mxu0 0.0
  %865 = vmatpush1.xpose.msra.mxu0 %v856
  %866 = vmatprep.subr.mxu0 0.0
  %867 = vmatpush1.xpose.msra.mxu0 %v858
  %868 = vmatprep.subr.mxu0 0.0
  %869 = vmatpush1.xpose.msra.mxu0 %v860
  %870 = vmatprep.subr.mxu0 0.0
  %871 = vmatpush1.xpose.msra.mxu0 0.0
  %872 = vmatprep.subr.mxu0 0.0
  %873 = vmatpush1.xpose.msra.mxu0 0.0
  %874 = vmatprep.subr.mxu0 0.0
  %875 = vmatpush1.xpose.msra.mxu0 0.0
  %876 = vmatprep.subr.mxu0 0.0
  %877 = vmatpush1.xpose.msra.mxu0 0.0
  %878 = vmatprep.subr.mxu0 0.0
  %879 = vmatpush1.xpose.msra.mxu0 0.0
  %880 = vmatprep.subr.mxu0 0.0
  %881 = vmatpush1.xpose.msra.mxu0 0.0
  %882 = vmatprep.subr.mxu0 0.0
  %883 = vmatpush1.xpose.msra.mxu0 0.0
  %884 = vmatprep.subr.mxu0 0.0
  %885 = vmatpush1.xpose.msra.mxu0 0.0
  %886 = vmatprep.subr.mxu0 0.0
  %887 = vmatpush1.xpose.msra.mxu0 0.0
  %888 = vmatprep.subr.mxu0 0.0
  %889 = vmatpush1.xpose.msra.mxu0 0.0
  %890 = vmatprep.subr.mxu0 0.0
  %891 = vmatpush1.xpose.msra.mxu0 0.0
  %892 = vmatprep.subr.mxu0 0.0
  %893 = vmatpush1.xpose.msra.mxu0 0.0
  %894 = vmatprep.subr.mxu0 0.0
  %895 = vmatpush1.xpose.msra.mxu0 0.0
  %896 = vmatprep.subr.mxu0 0.0
  %897 = vmatpush1.xpose.msra.mxu0 0.0
  %898 = vmatprep.subr.mxu0 0.0
  %899 = vmatpush1.xpose.msra.mxu0 0.0
  %900 = vmatprep.subr.mxu0 0.0
  %901 = vmatpush1.xpose.msra.mxu0 0.0
  %902 = vmatprep.subr.mxu0 0.0
  %903 = vmatpush1.xpose.msra.mxu0 0.0
  %904 = vmatprep.subr.mxu0 0.0
  %905 = vmatpush1.xpose.msra.mxu0 0.0
  %906 = vmatprep.subr.mxu0 0.0
  %907 = vmatpush1.xpose.msra.mxu0 0.0
  %908 = vmatprep.subr.mxu0 0.0
  %909 = vmatpush1.xpose.msra.mxu0 0.0
  %910 = vmatprep.subr.mxu0 0.0
  %911 = vmatpush1.xpose.msra.mxu0 0.0
  %912 = vmatprep.subr.mxu0 0.0
  %913 = vmatpush1.xpose.msra.mxu0 0.0
  %914 = vmatprep.subr.mxu0 0.0
  %915 = vmatpush1.xpose.msra.mxu0 0.0
  %916 = vmatprep.subr.mxu0 0.0
  %917 = vmatpush1.xpose.msra.mxu0 0.0
  %918 = vmatprep.subr.mxu0 0.0
  %919 = vmatpush1.xpose.msra.mxu0 0.0
  %920 = vmatprep.subr.mxu0 0.0
  %921 = vmatpush1.xpose.msra.mxu0 0.0
  %922 = vmatprep.subr.mxu0 0.0
  %923 = vmatpush1.xpose.msra.mxu0 0.0
  %924 = vmatprep.subr.mxu0 0.0
  %925 = vmatpush1.xpose.msra.mxu0 0.0
  %926 = vmatprep.mubr.f32.mxu0 0.0
  %927 = vmatmul.mubr.f32.gmra.mrb[0].mxu0 %v852
  %v928 = vpop.f32.mrb[0].mxu0
  %v929 = vadd.f32 0.0, %v928
  %v930 = vpop.f32.mrb[0].mxu0
  %931 = vdwg.mxu0
  %936 = vrot.lane.b32.xlu0 %v499, 96
  %v937 = vpop.permute.xlu0 %936
  %938 = vrot.lane.b32.xlu0 %v500, 96
  %v939 = vpop.permute.xlu0 %938
  %940 = vrot.lane.b32.xlu0 %v501, 96
  %v941 = vpop.permute.xlu0 %940
  %942 = vrot.lane.b32.xlu0 %v502, 96
  %v943 = vpop.permute.xlu0 %942
  %v945 = vsel %vm571, %v463, 0
  %v947 = vsel %vm571, %v937, 0
  %v949 = vsel %vm571, %v939, 0
  %v951 = vsel %vm571, %v941, 0
  %v953 = vsel %vm571, %v943, 0
  %955 = vmatprep.subr.mxu0 0.0
  %956 = vmatpush1.xpose.msra.mxu0 %v947
  %957 = vmatprep.subr.mxu0 0.0
  %958 = vmatpush1.xpose.msra.mxu0 %v949
  %959 = vmatprep.subr.mxu0 0.0
  %960 = vmatpush1.xpose.msra.mxu0 %v951
  %961 = vmatprep.subr.mxu0 0.0
  %962 = vmatpush1.xpose.msra.mxu0 %v953
  %963 = vmatprep.subr.mxu0 0.0
  %964 = vmatpush1.xpose.msra.mxu0 0.0
  %965 = vmatprep.subr.mxu0 0.0
  %966 = vmatpush1.xpose.msra.mxu0 0.0
  %967 = vmatprep.subr.mxu0 0.0
  %968 = vmatpush1.xpose.msra.mxu0 0.0
  %969 = vmatprep.subr.mxu0 0.0
  %970 = vmatpush1.xpose.msra.mxu0 0.0
  %971 = vmatprep.subr.mxu0 0.0
  %972 = vmatpush1.xpose.msra.mxu0 0.0
  %973 = vmatprep.subr.mxu0 0.0
  %974 = vmatpush1.xpose.msra.mxu0 0.0
  %975 = vmatprep.subr.mxu0 0.0
  %976 = vmatpush1.xpose.msra.mxu0 0.0
  %977 = vmatprep.subr.mxu0 0.0
  %978 = vmatpush1.xpose.msra.mxu0 0.0
  %979 = vmatprep.subr.mxu0 0.0
  %980 = vmatpush1.xpose.msra.mxu0 0.0
  %981 = vmatprep.subr.mxu0 0.0
  %982 = vmatpush1.xpose.msra.mxu0 0.0
  %983 = vmatprep.subr.mxu0 0.0
  %984 = vmatpush1.xpose.msra.mxu0 0.0
  %985 = vmatprep.subr.mxu0 0.0
  %986 = vmatpush1.xpose.msra.mxu0 0.0
  %987 = vmatprep.subr.mxu0 0.0
  %988 = vmatpush1.xpose.msra.mxu0 0.0
  %989 = vmatprep.subr.mxu0 0.0
  %990 = vmatpush1.xpose.msra.mxu0 0.0
  %991 = vmatprep.subr.mxu0 0.0
  %992 = vmatpush1.xpose.msra.mxu0 0.0
  %993 = vmatprep.subr.mxu0 0.0
  %994 = vmatpush1.xpose.msra.mxu0 0.0
  %995 = vmatprep.subr.mxu0 0.0
  %996 = vmatpush1.xpose.msra.mxu0 0.0
  %997 = vmatprep.subr.mxu0 0.0
  %998 = vmatpush1.xpose.msra.mxu0 0.0
  %999 = vmatprep.subr.mxu0 0.0
  %1000 = vmatpush1.xpose.msra.mxu0 0.0
  %1001 = vmatprep.subr.mxu0 0.0
  %1002 = vmatpush1.xpose.msra.mxu0 0.0
  %1003 = vmatprep.subr.mxu0 0.0
  %1004 = vmatpush1.xpose.msra.mxu0 0.0
  %1005 = vmatprep.subr.mxu0 0.0
  %1006 = vmatpush1.xpose.msra.mxu0 0.0
  %1007 = vmatprep.subr.mxu0 0.0
  %1008 = vmatpush1.xpose.msra.mxu0 0.0
  %1009 = vmatprep.subr.mxu0 0.0
  %1010 = vmatpush1.xpose.msra.mxu0 0.0
  %1011 = vmatprep.subr.mxu0 0.0
  %1012 = vmatpush1.xpose.msra.mxu0 0.0
  %1013 = vmatprep.subr.mxu0 0.0
  %1014 = vmatpush1.xpose.msra.mxu0 0.0
  %1015 = vmatprep.subr.mxu0 0.0
  %1016 = vmatpush1.xpose.msra.mxu0 0.0
  %1017 = vmatprep.subr.mxu0 0.0
  %1018 = vmatpush1.xpose.msra.mxu0 0.0
  %1019 = vmatprep.mubr.f32.mxu0 0.0
  %1020 = vmatmul.mubr.f32.gmra.mrb[0].mxu0 %v945
  %v1021 = vpop.f32.mrb[0].mxu0
  %v1022 = vadd.f32 0.0, %v1021
  %v1023 = vpop.f32.mrb[0].mxu0
  %1024 = vdwg.mxu0
  %1029 = vrot.lane.b32.xlu0 %v503, 96
  %v1030 = vpop.permute.xlu0 %1029
  %1031 = vrot.lane.b32.xlu0 %v504, 96
  %v1032 = vpop.permute.xlu0 %1031
  %1033 = vrot.lane.b32.xlu0 %v505, 96
  %v1034 = vpop.permute.xlu0 %1033
  %1035 = vrot.lane.b32.xlu0 %v506, 96
  %v1036 = vpop.permute.xlu0 %1035
  %v1038 = vsel %vm571, %v464, 0
  %v1040 = vsel %vm571, %v1030, 0
  %v1042 = vsel %vm571, %v1032, 0
  %v1044 = vsel %vm571, %v1034, 0
  %v1046 = vsel %vm571, %v1036, 0
  %1048 = vmatprep.subr.mxu0 0.0
  %1049 = vmatpush1.xpose.msra.mxu0 %v1040
  %1050 = vmatprep.subr.mxu0 0.0
  %1051 = vmatpush1.xpose.msra.mxu0 %v1042
  %1052 = vmatprep.subr.mxu0 0.0
  %1053 = vmatpush1.xpose.msra.mxu0 %v1044
  %1054 = vmatprep.subr.mxu0 0.0
  %1055 = vmatpush1.xpose.msra.mxu0 %v1046
  %1056 = vmatprep.subr.mxu0 0.0
  %1057 = vmatpush1.xpose.msra.mxu0 0.0
  %1058 = vmatprep.subr.mxu0 0.0
  %1059 = vmatpush1.xpose.msra.mxu0 0.0
  %1060 = vmatprep.subr.mxu0 0.0
  %1061 = vmatpush1.xpose.msra.mxu0 0.0
  %1062 = vmatprep.subr.mxu0 0.0
  %1063 = vmatpush1.xpose.msra.mxu0 0.0
  %1064 = vmatprep.subr.mxu0 0.0
  %1065 = vmatpush1.xpose.msra.mxu0 0.0
  %1066 = vmatprep.subr.mxu0 0.0
  %1067 = vmatpush1.xpose.msra.mxu0 0.0
  %1068 = vmatprep.subr.mxu0 0.0
  %1069 = vmatpush1.xpose.msra.mxu0 0.0
  %1070 = vmatprep.subr.mxu0 0.0
  %1071 = vmatpush1.xpose.msra.mxu0 0.0
  %1072 = vmatprep.subr.mxu0 0.0
  %1073 = vmatpush1.xpose.msra.mxu0 0.0
  %1074 = vmatprep.subr.mxu0 0.0
  %1075 = vmatpush1.xpose.msra.mxu0 0.0
  %1076 = vmatprep.subr.mxu0 0.0
  %1077 = vmatpush1.xpose.msra.mxu0 0.0
  %1078 = vmatprep.subr.mxu0 0.0
  %1079 = vmatpush1.xpose.msra.mxu0 0.0
  %1080 = vmatprep.subr.mxu0 0.0
  %1081 = vmatpush1.xpose.msra.mxu0 0.0
  %1082 = vmatprep.subr.mxu0 0.0
  %1083 = vmatpush1.xpose.msra.mxu0 0.0
  %1084 = vmatprep.subr.mxu0 0.0
  %1085 = vmatpush1.xpose.msra.mxu0 0.0
  %1086 = vmatprep.subr.mxu0 0.0
  %1087 = vmatpush1.xpose.msra.mxu0 0.0
  %1088 = vmatprep.subr.mxu0 0.0
  %1089 = vmatpush1.xpose.msra.mxu0 0.0
  %1090 = vmatprep.subr.mxu0 0.0
  %1091 = vmatpush1.xpose.msra.mxu0 0.0
  %1092 = vmatprep.subr.mxu0 0.0
  %1093 = vmatpush1.xpose.msra.mxu0 0.0
  %1094 = vmatprep.subr.mxu0 0.0
  %1095 = vmatpush1.xpose.msra.mxu0 0.0
  %1096 = vmatprep.subr.mxu0 0.0
  %1097 = vmatpush1.xpose.msra.mxu0 0.0
  %1098 = vmatprep.subr.mxu0 0.0
  %1099 = vmatpush1.xpose.msra.mxu0 0.0
  %1100 = vmatprep.subr.mxu0 0.0
  %1101 = vmatpush1.xpose.msra.mxu0 0.0
  %1102 = vmatprep.subr.mxu0 0.0
  %1103 = vmatpush1.xpose.msra.mxu0 0.0
  %1104 = vmatprep.subr.mxu0 0.0
  %1105 = vmatpush1.xpose.msra.mxu0 0.0
  %1106 = vmatprep.subr.mxu0 0.0
  %1107 = vmatpush1.xpose.msra.mxu0 0.0
  %1108 = vmatprep.subr.mxu0 0.0
  %1109 = vmatpush1.xpose.msra.mxu0 0.0
  %1110 = vmatprep.subr.mxu0 0.0
  %1111 = vmatpush1.xpose.msra.mxu0 0.0
  %1112 = vmatprep.mubr.f32.mxu0 0.0
  %1113 = vmatmul.mubr.f32.gmra.mrb[0].mxu0 %v1038
  %v1114 = vpop.f32.mrb[0].mxu0
  %v1115 = vadd.f32 0.0, %v1114
  %v1116 = vpop.f32.mrb[0].mxu0
  %1117 = vdwg.mxu0
  %1122 = vrot.lane.b32.xlu0 %v507, 96
  %v1123 = vpop.permute.xlu0 %1122
  %1124 = vrot.lane.b32.xlu0 %v508, 96
  %v1125 = vpop.permute.xlu0 %1124
  %1126 = vrot.lane.b32.xlu0 %v509, 96
  %v1127 = vpop.permute.xlu0 %1126
  %1128 = vrot.lane.b32.xlu0 %v510, 96
  %v1129 = vpop.permute.xlu0 %1128
  %v1131 = vsel %vm571, %v465, 0
  %v1133 = vsel %vm571, %v1123, 0
  %v1135 = vsel %vm571, %v1125, 0
  %v1137 = vsel %vm571, %v1127, 0
  %v1139 = vsel %vm571, %v1129, 0
  %1141 = vmatprep.subr.mxu0 0.0
  %1142 = vmatpush1.xpose.msra.mxu0 %v1133
  %1143 = vmatprep.subr.mxu0 0.0
  %1144 = vmatpush1.xpose.msra.mxu0 %v1135
  %1145 = vmatprep.subr.mxu0 0.0
  %1146 = vmatpush1.xpose.msra.mxu0 %v1137
  %1147 = vmatprep.subr.mxu0 0.0
  %1148 = vmatpush1.xpose.msra.mxu0 %v1139
  %1149 = vmatprep.subr.mxu0 0.0
  %1150 = vmatpush1.xpose.msra.mxu0 0.0
  %1151 = vmatprep.subr.mxu0 0.0
  %1152 = vmatpush1.xpose.msra.mxu0 0.0
  %1153 = vmatprep.subr.mxu0 0.0
  %1154 = vmatpush1.xpose.msra.mxu0 0.0
  %1155 = vmatprep.subr.mxu0 0.0
  %1156 = vmatpush1.xpose.msra.mxu0 0.0
  %1157 = vmatprep.subr.mxu0 0.0
  %1158 = vmatpush1.xpose.msra.mxu0 0.0
  %1159 = vmatprep.subr.mxu0 0.0
  %1160 = vmatpush1.xpose.msra.mxu0 0.0
  %1161 = vmatprep.subr.mxu0 0.0
  %1162 = vmatpush1.xpose.msra.mxu0 0.0
  %1163 = vmatprep.subr.mxu0 0.0
  %1164 = vmatpush1.xpose.msra.mxu0 0.0
  %1165 = vmatprep.subr.mxu0 0.0
  %1166 = vmatpush1.xpose.msra.mxu0 0.0
  %1167 = vmatprep.subr.mxu0 0.0
  %1168 = vmatpush1.xpose.msra.mxu0 0.0
  %1169 = vmatprep.subr.mxu0 0.0
  %1170 = vmatpush1.xpose.msra.mxu0 0.0
  %1171 = vmatprep.subr.mxu0 0.0
  %1172 = vmatpush1.xpose.msra.mxu0 0.0
  %1173 = vmatprep.subr.mxu0 0.0
  %1174 = vmatpush1.xpose.msra.mxu0 0.0
  %1175 = vmatprep.subr.mxu0 0.0
  %1176 = vmatpush1.xpose.msra.mxu0 0.0
  %1177 = vmatprep.subr.mxu0 0.0
  %1178 = vmatpush1.xpose.msra.mxu0 0.0
  %1179 = vmatprep.subr.mxu0 0.0
  %1180 = vmatpush1.xpose.msra.mxu0 0.0
  %1181 = vmatprep.subr.mxu0 0.0
  %1182 = vmatpush1.xpose.msra.mxu0 0.0
  %1183 = vmatprep.subr.mxu0 0.0
  %1184 = vmatpush1.xpose.msra.mxu0 0.0
  %1185 = vmatprep.subr.mxu0 0.0
  %1186 = vmatpush1.xpose.msra.mxu0 0.0
  %1187 = vmatprep.subr.mxu0 0.0
  %1188 = vmatpush1.xpose.msra.mxu0 0.0
  %1189 = vmatprep.subr.mxu0 0.0
  %1190 = vmatpush1.xpose.msra.mxu0 0.0
  %1191 = vmatprep.subr.mxu0 0.0
  %1192 = vmatpush1.xpose.msra.mxu0 0.0
  %1193 = vmatprep.subr.mxu0 0.0
  %1194 = vmatpush1.xpose.msra.mxu0 0.0
  %1195 = vmatprep.subr.mxu0 0.0
  %1196 = vmatpush1.xpose.msra.mxu0 0.0
  %1197 = vmatprep.subr.mxu0 0.0
  %1198 = vmatpush1.xpose.msra.mxu0 0.0
  %1199 = vmatprep.subr.mxu0 0.0
  %1200 = vmatpush1.xpose.msra.mxu0 0.0
  %1201 = vmatprep.subr.mxu0 0.0
  %1202 = vmatpush1.xpose.msra.mxu0 0.0
  %1203 = vmatprep.subr.mxu0 0.0
  %1204 = vmatpush1.xpose.msra.mxu0 0.0
  %1205 = vmatprep.mubr.f32.mxu0 0.0
  %1206 = vmatmul.mubr.f32.gmra.mrb[0].mxu0 %v1131
  %v1207 = vpop.f32.mrb[0].mxu0
  %v1208 = vadd.f32 0.0, %v1207
  %v1209 = vpop.f32.mrb[0].mxu0
  %1210 = vdwg.mxu0
  %1215 = vrot.lane.b32.xlu0 %v511, 96
  %v1216 = vpop.permute.xlu0 %1215
  %1217 = vrot.lane.b32.xlu0 %v512, 96
  %v1218 = vpop.permute.xlu0 %1217
  %1219 = vrot.lane.b32.xlu0 %v513, 96
  %v1220 = vpop.permute.xlu0 %1219
  %1221 = vrot.lane.b32.xlu0 %v514, 96
  %v1222 = vpop.permute.xlu0 %1221
  %v1224 = vsel %vm571, %v466, 0
  %v1226 = vsel %vm571, %v1216, 0
  %v1228 = vsel %vm571, %v1218, 0
  %v1230 = vsel %vm571, %v1220, 0
  %v1232 = vsel %vm571, %v1222, 0
  %1234 = vmatprep.subr.mxu0 0.0
  %1235 = vmatpush1.xpose.msra.mxu0 %v1226
  %1236 = vmatprep.subr.mxu0 0.0
  %1237 = vmatpush1.xpose.msra.mxu0 %v1228
  %1238 = vmatprep.subr.mxu0 0.0
  %1239 = vmatpush1.xpose.msra.mxu0 %v1230
  %1240 = vmatprep.subr.mxu0 0.0
  %1241 = vmatpush1.xpose.msra.mxu0 %v1232
  %1242 = vmatprep.subr.mxu0 0.0
  %1243 = vmatpush1.xpose.msra.mxu0 0.0
  %1244 = vmatprep.subr.mxu0 0.0
  %1245 = vmatpush1.xpose.msra.mxu0 0.0
  %1246 = vmatprep.subr.mxu0 0.0
  %1247 = vmatpush1.xpose.msra.mxu0 0.0
  %1248 = vmatprep.subr.mxu0 0.0
  %1249 = vmatpush1.xpose.msra.mxu0 0.0
  %1250 = vmatprep.subr.mxu0 0.0
  %1251 = vmatpush1.xpose.msra.mxu0 0.0
  %1252 = vmatprep.subr.mxu0 0.0
  %1253 = vmatpush1.xpose.msra.mxu0 0.0
  %1254 = vmatprep.subr.mxu0 0.0
  %1255 = vmatpush1.xpose.msra.mxu0 0.0
  %1256 = vmatprep.subr.mxu0 0.0
  %1257 = vmatpush1.xpose.msra.mxu0 0.0
  %1258 = vmatprep.subr.mxu0 0.0
  %1259 = vmatpush1.xpose.msra.mxu0 0.0
  %1260 = vmatprep.subr.mxu0 0.0
  %1261 = vmatpush1.xpose.msra.mxu0 0.0
  %1262 = vmatprep.subr.mxu0 0.0
  %1263 = vmatpush1.xpose.msra.mxu0 0.0
  %1264 = vmatprep.subr.mxu0 0.0
  %1265 = vmatpush1.xpose.msra.mxu0 0.0
  %1266 = vmatprep.subr.mxu0 0.0
  %1267 = vmatpush1.xpose.msra.mxu0 0.0
  %1268 = vmatprep.subr.mxu0 0.0
  %1269 = vmatpush1.xpose.msra.mxu0 0.0
  %1270 = vmatprep.subr.mxu0 0.0
  %1271 = vmatpush1.xpose.msra.mxu0 0.0
  %1272 = vmatprep.subr.mxu0 0.0
  %1273 = vmatpush1.xpose.msra.mxu0 0.0
  %1274 = vmatprep.subr.mxu0 0.0
  %1275 = vmatpush1.xpose.msra.mxu0 0.0
  %1276 = vmatprep.subr.mxu0 0.0
  %1277 = vmatpush1.xpose.msra.mxu0 0.0
  %1278 = vmatprep.subr.mxu0 0.0
  %1279 = vmatpush1.xpose.msra.mxu0 0.0
  %1280 = vmatprep.subr.mxu0 0.0
  %1281 = vmatpush1.xpose.msra.mxu0 0.0
  %1282 = vmatprep.subr.mxu0 0.0
  %1283 = vmatpush1.xpose.msra.mxu0 0.0
  %1284 = vmatprep.subr.mxu0 0.0
  %1285 = vmatpush1.xpose.msra.mxu0 0.0
  %1286 = vmatprep.subr.mxu0 0.0
  %1287 = vmatpush1.xpose.msra.mxu0 0.0
  %1288 = vmatprep.subr.mxu0 0.0
  %1289 = vmatpush1.xpose.msra.mxu0 0.0
  %1290 = vmatprep.subr.mxu0 0.0
  %1291 = vmatpush1.xpose.msra.mxu0 0.0
  %1292 = vmatprep.subr.mxu0 0.0
  %1293 = vmatpush1.xpose.msra.mxu0 0.0
  %1294 = vmatprep.subr.mxu0 0.0
  %1295 = vmatpush1.xpose.msra.mxu0 0.0
  %1296 = vmatprep.subr.mxu0 0.0
  %1297 = vmatpush1.xpose.msra.mxu0 0.0
  %1298 = vmatprep.mubr.f32.mxu0 0.0
  %1299 = vmatmul.mubr.f32.gmra.mrb[0].mxu0 %v1224
  %v1300 = vpop.f32.mrb[0].mxu0
  %v1301 = vadd.f32 0.0, %v1300
  %v1302 = vpop.f32.mrb[0].mxu0
  %1303 = vdwg.mxu0
  %v1304 = vsel %vm571, %v650, -inf
  %1305 = vmax.xlane.f32.xlu0 %v1304
  %v1306 = vpop.xlane.xlu0 %1305
  %v1307 = vsel %vm571, %v743, -inf
  %1308 = vmax.xlane.f32.xlu0 %v1307
  %v1309 = vpop.xlane.xlu0 %1308
  %v1310 = vsel %vm571, %v836, -inf
  %1311 = vmax.xlane.f32.xlu0 %v1310
  %v1312 = vpop.xlane.xlu0 %1311
  %v1313 = vsel %vm571, %v929, -inf
  %1314 = vmax.xlane.f32.xlu0 %v1313
  %v1315 = vpop.xlane.xlu0 %1314
  %v1316 = vsel %vm571, %v1022, -inf
  %1317 = vmax.xlane.f32.xlu0 %v1316
  %v1318 = vpop.xlane.xlu0 %1317
  %v1319 = vsel %vm571, %v1115, -inf
  %1320 = vmax.xlane.f32.xlu0 %v1319
  %v1321 = vpop.xlane.xlu0 %1320
  %v1322 = vsel %vm571, %v1208, -inf
  %1323 = vmax.xlane.f32.xlu0 %v1322
  %v1324 = vpop.xlane.xlu0 %1323
  %v1325 = vsel %vm571, %v1301, -inf
  %1326 = vmax.xlane.f32.xlu0 %v1325
  %v1327 = vpop.xlane.xlu0 %1326
  %v1328 = vsub.f32 %v650, %v1306
  %v1329 = vsub.f32 %v743, %v1309
  %v1330 = vsub.f32 %v836, %v1312
  %v1331 = vsub.f32 %v929, %v1315
  %v1332 = vsub.f32 %v1022, %v1318
  %v1333 = vsub.f32 %v1115, %v1321
  %v1334 = vsub.f32 %v1208, %v1324
  %v1335 = vsub.f32 %v1301, %v1327
  %v1336 = vmul.f32 %v1328, 1.442695
  %v1337 = vpow.pop %v1336
  %v1338 = vmul.f32 %v1329, 1.442695
  %v1339 = vpow.pop %v1338
  %v1340 = vmul.f32 %v1330, 1.442695
  %v1341 = vpow.pop %v1340
  %v1342 = vmul.f32 %v1331, 1.442695
  %v1343 = vpow.pop %v1342
  %v1344 = vmul.f32 %v1332, 1.442695
  %v1345 = vpow.pop %v1344
  %v1346 = vmul.f32 %v1333, 1.442695
  %v1347 = vpow.pop %v1346
  %v1348 = vmul.f32 %v1334, 1.442695
  %v1349 = vpow.pop %v1348
  %v1350 = vmul.f32 %v1335, 1.442695
  %v1351 = vpow.pop %v1350
  %v1353 = vsel %vm571, %v1337, 0
  %v1356 = vsel %vm571, %v1339, 0
  %v1359 = vsel %vm571, %v1341, 0
  %v1362 = vsel %vm571, %v1343, 0
  %v1365 = vsel %vm571, %v1345, 0
  %v1368 = vsel %vm571, %v1347, 0
  %v1371 = vsel %vm571, %v1349, 0
  %v1374 = vsel %vm571, %v1351, 0
  %1376 = vmatprep.subr.mxu0 0.0
  %1377 = vmatpush1.msra.mxu0 %v33
  %1378 = vmatprep.subr.mxu0 0.0
  %1379 = vmatpush1.msra.mxu0 %v34
  %1380 = vmatprep.subr.mxu0 0.0
  %1381 = vmatpush1.msra.mxu0 %v35
  %1382 = vmatprep.subr.mxu0 0.0
  %1383 = vmatpush1.msra.mxu0 %v36
  %1384 = vmatprep.subr.mxu0 0.0
  %1385 = vmatpush1.msra.mxu0 0.0
  %1386 = vmatprep.subr.mxu0 0.0
  %1387 = vmatpush1.msra.mxu0 0.0
  %1388 = vmatprep.subr.mxu0 0.0
  %1389 = vmatpush1.msra.mxu0 0.0
  %1390 = vmatprep.subr.mxu0 0.0
  %1391 = vmatpush1.msra.mxu0 0.0
  %1392 = vmatprep.subr.mxu0 0.0
  %1393 = vmatpush1.msra.mxu0 0.0
  %1394 = vmatprep.subr.mxu0 0.0
  %1395 = vmatpush1.msra.mxu0 0.0
  %1396 = vmatprep.subr.mxu0 0.0
  %1397 = vmatpush1.msra.mxu0 0.0
  %1398 = vmatprep.subr.mxu0 0.0
  %1399 = vmatpush1.msra.mxu0 0.0
  %1400 = vmatprep.subr.mxu0 0.0
  %1401 = vmatpush1.msra.mxu0 0.0
  %1402 = vmatprep.subr.mxu0 0.0
  %1403 = vmatpush1.msra.mxu0 0.0
  %1404 = vmatprep.subr.mxu0 0.0
  %1405 = vmatpush1.msra.mxu0 0.0
  %1406 = vmatprep.subr.mxu0 0.0
  %1407 = vmatpush1.msra.mxu0 0.0
  %1408 = vmatprep.subr.mxu0 0.0
  %1409 = vmatpush1.msra.mxu0 0.0
  %1410 = vmatprep.subr.mxu0 0.0
  %1411 = vmatpush1.msra.mxu0 0.0
  %1412 = vmatprep.subr.mxu0 0.0
  %1413 = vmatpush1.msra.mxu0 0.0
  %1414 = vmatprep.subr.mxu0 0.0
  %1415 = vmatpush1.msra.mxu0 0.0
  %1416 = vmatprep.subr.mxu0 0.0
  %1417 = vmatpush1.msra.mxu0 0.0
  %1418 = vmatprep.subr.mxu0 0.0
  %1419 = vmatpush1.msra.mxu0 0.0
  %1420 = vmatprep.subr.mxu0 0.0
  %1421 = vmatpush1.msra.mxu0 0.0
  %1422 = vmatprep.subr.mxu0 0.0
  %1423 = vmatpush1.msra.mxu0 0.0
  %1424 = vmatprep.subr.mxu0 0.0
  %1425 = vmatpush1.msra.mxu0 0.0
  %1426 = vmatprep.subr.mxu0 0.0
  %1427 = vmatpush1.msra.mxu0 0.0
  %1428 = vmatprep.subr.mxu0 0.0
  %1429 = vmatpush1.msra.mxu0 0.0
  %1430 = vmatprep.subr.mxu0 0.0
  %1431 = vmatpush1.msra.mxu0 0.0
  %1432 = vmatprep.subr.mxu0 0.0
  %1433 = vmatpush1.msra.mxu0 0.0
  %1434 = vmatprep.subr.mxu0 0.0
  %1435 = vmatpush1.msra.mxu0 0.0
  %1436 = vmatprep.subr.mxu0 0.0
  %1437 = vmatpush1.msra.mxu0 0.0
  %1438 = vmatprep.subr.mxu0 0.0
  %1439 = vmatpush1.msra.mxu0 0.0
  %1440 = vmatprep.mubr.f32.mxu0 0.0
  %1441 = vmatmul.mubr.f32.gmra.mrb[0].mxu0 %v1353
  %v1442 = vpop.f32.mrb[0].mxu0
  %v1443 = vadd.f32 0.0, %v1442
  %v1444 = vpop.f32.mrb[0].mxu0
  %1445 = vmatprep.mubr.f32.mxu0 0.0
  %1446 = vmatmul.mubr.f32.gmra.mrb[0].mxu0 %v1356
  %v1447 = vpop.f32.mrb[0].mxu0
  %v1448 = vadd.f32 0.0, %v1447
  %v1449 = vpop.f32.mrb[0].mxu0
  %1450 = vmatprep.mubr.f32.mxu0 0.0
  %1451 = vmatmul.mubr.f32.gmra.mrb[0].mxu0 %v1359
  %v1452 = vpop.f32.mrb[0].mxu0
  %v1453 = vadd.f32 0.0, %v1452
  %v1454 = vpop.f32.mrb[0].mxu0
  %1455 = vmatprep.mubr.f32.mxu0 0.0
  %1456 = vmatmul.mubr.f32.gmra.mrb[0].mxu0 %v1362
  %v1457 = vpop.f32.mrb[0].mxu0
  %v1458 = vadd.f32 0.0, %v1457
  %v1459 = vpop.f32.mrb[0].mxu0
  %1460 = vmatprep.mubr.f32.mxu0 0.0
  %1461 = vmatmul.mubr.f32.gmra.mrb[0].mxu0 %v1365
  %v1462 = vpop.f32.mrb[0].mxu0
  %v1463 = vadd.f32 0.0, %v1462
  %v1464 = vpop.f32.mrb[0].mxu0
  %1465 = vmatprep.mubr.f32.mxu0 0.0
  %1466 = vmatmul.mubr.f32.gmra.mrb[0].mxu0 %v1368
  %v1467 = vpop.f32.mrb[0].mxu0
  %v1468 = vadd.f32 0.0, %v1467
  %v1469 = vpop.f32.mrb[0].mxu0
  %1470 = vmatprep.mubr.f32.mxu0 0.0
  %1471 = vmatmul.mubr.f32.gmra.mrb[0].mxu0 %v1371
  %v1472 = vpop.f32.mrb[0].mxu0
  %v1473 = vadd.f32 0.0, %v1472
  %v1474 = vpop.f32.mrb[0].mxu0
  %1475 = vmatprep.mubr.f32.mxu0 0.0
  %1476 = vmatmul.mubr.f32.gmra.mrb[0].mxu0 %v1374
  %v1477 = vpop.f32.mrb[0].mxu0
  %v1478 = vadd.f32 0.0, %v1477
  %v1479 = vpop.f32.mrb[0].mxu0
  %1480 = vdwg.mxu0
  %v1481 = vrcp.pop %v1443
  %v1482 = vrcp.pop %v1448
  %v1483 = vrcp.pop %v1453
  %v1484 = vrcp.pop %v1458
  %v1485 = vrcp.pop %v1463
  %v1486 = vrcp.pop %v1468
  %v1487 = vrcp.pop %v1473
  %v1488 = vrcp.pop %v1478
  %v1489 = vmul.f32 %v1337, %v1481
  %v1490 = vmul.f32 %v1339, %v1482
  %v1491 = vmul.f32 %v1341, %v1483
  %v1492 = vmul.f32 %v1343, %v1484
  %v1493 = vmul.f32 %v1345, %v1485
  %v1494 = vmul.f32 %v1347, %v1486
  %v1495 = vmul.f32 %v1349, %v1487
  %v1496 = vmul.f32 %v1351, %v1488
  %1501 = vrot.lane.b32.xlu0 %v527, 64
  %v1502 = vpop.permute.xlu0 %1501
  %1503 = vrot.lane.b32.xlu0 %v528, 64
  %v1504 = vpop.permute.xlu0 %1503
  %1505 = vrot.lane.b32.xlu0 %v529, 64
  %v1506 = vpop.permute.xlu0 %1505
  %1507 = vrot.lane.b32.xlu0 %v530, 64
  %v1508 = vpop.permute.xlu0 %1507
  %v1514 = vsel %vm571, %v1489, 0
  %1516 = vmatprep.subr.mxu0 0.0
  %1517 = vmatpush1.msra.mxu0 %v1502
  %1518 = vmatprep.subr.mxu0 0.0
  %1519 = vmatpush1.msra.mxu0 %v1504
  %1520 = vmatprep.subr.mxu0 0.0
  %1521 = vmatpush1.msra.mxu0 %v1506
  %1522 = vmatprep.subr.mxu0 0.0
  %1523 = vmatpush1.msra.mxu0 %v1508
  %1524 = vmatprep.subr.mxu0 0.0
  %1525 = vmatpush1.msra.mxu0 0.0
  %1526 = vmatprep.subr.mxu0 0.0
  %1527 = vmatpush1.msra.mxu0 0.0
  %1528 = vmatprep.subr.mxu0 0.0
  %1529 = vmatpush1.msra.mxu0 0.0
  %1530 = vmatprep.subr.mxu0 0.0
  %1531 = vmatpush1.msra.mxu0 0.0
  %1532 = vmatprep.subr.mxu0 0.0
  %1533 = vmatpush1.msra.mxu0 0.0
  %1534 = vmatprep.subr.mxu0 0.0
  %1535 = vmatpush1.msra.mxu0 0.0
  %1536 = vmatprep.subr.mxu0 0.0
  %1537 = vmatpush1.msra.mxu0 0.0
  %1538 = vmatprep.subr.mxu0 0.0
  %1539 = vmatpush1.msra.mxu0 0.0
  %1540 = vmatprep.subr.mxu0 0.0
  %1541 = vmatpush1.msra.mxu0 0.0
  %1542 = vmatprep.subr.mxu0 0.0
  %1543 = vmatpush1.msra.mxu0 0.0
  %1544 = vmatprep.subr.mxu0 0.0
  %1545 = vmatpush1.msra.mxu0 0.0
  %1546 = vmatprep.subr.mxu0 0.0
  %1547 = vmatpush1.msra.mxu0 0.0
  %1548 = vmatprep.subr.mxu0 0.0
  %1549 = vmatpush1.msra.mxu0 0.0
  %1550 = vmatprep.subr.mxu0 0.0
  %1551 = vmatpush1.msra.mxu0 0.0
  %1552 = vmatprep.subr.mxu0 0.0
  %1553 = vmatpush1.msra.mxu0 0.0
  %1554 = vmatprep.subr.mxu0 0.0
  %1555 = vmatpush1.msra.mxu0 0.0
  %1556 = vmatprep.subr.mxu0 0.0
  %1557 = vmatpush1.msra.mxu0 0.0
  %1558 = vmatprep.subr.mxu0 0.0
  %1559 = vmatpush1.msra.mxu0 0.0
  %1560 = vmatprep.subr.mxu0 0.0
  %1561 = vmatpush1.msra.mxu0 0.0
  %1562 = vmatprep.subr.mxu0 0.0
  %1563 = vmatpush1.msra.mxu0 0.0
  %1564 = vmatprep.subr.mxu0 0.0
  %1565 = vmatpush1.msra.mxu0 0.0
  %1566 = vmatprep.subr.mxu0 0.0
  %1567 = vmatpush1.msra.mxu0 0.0
  %1568 = vmatprep.subr.mxu0 0.0
  %1569 = vmatpush1.msra.mxu0 0.0
  %1570 = vmatprep.subr.mxu0 0.0
  %1571 = vmatpush1.msra.mxu0 0.0
  %1572 = vmatprep.subr.mxu0 0.0
  %1573 = vmatpush1.msra.mxu0 0.0
  %1574 = vmatprep.subr.mxu0 0.0
  %1575 = vmatpush1.msra.mxu0 0.0
  %1576 = vmatprep.subr.mxu0 0.0
  %1577 = vmatpush1.msra.mxu0 0.0
  %1578 = vmatprep.subr.mxu0 0.0
  %1579 = vmatpush1.msra.mxu0 0.0
  %1580 = vmatprep.mubr.f32.mxu0 0.0
  %1581 = vmatmul.mubr.f32.gmra.mrb[0].mxu0 %v1514
  %v1582 = vpop.f32.mrb[0].mxu0
  %v1583 = vadd.f32 0.0, %v1582
  %v1584 = vpop.f32.mrb[0].mxu0
  %1585 = vdwg.mxu0
  %1590 = vrot.lane.b32.xlu0 %v531, 64
  %v1591 = vpop.permute.xlu0 %1590
  %1592 = vrot.lane.b32.xlu0 %v532, 64
  %v1593 = vpop.permute.xlu0 %1592
  %1594 = vrot.lane.b32.xlu0 %v533, 64
  %v1595 = vpop.permute.xlu0 %1594
  %1596 = vrot.lane.b32.xlu0 %v534, 64
  %v1597 = vpop.permute.xlu0 %1596
  %v1603 = vsel %vm571, %v1490, 0
  %1605 = vmatprep.subr.mxu0 0.0
  %1606 = vmatpush1.msra.mxu0 %v1591
  %1607 = vmatprep.subr.mxu0 0.0
  %1608 = vmatpush1.msra.mxu0 %v1593
  %1609 = vmatprep.subr.mxu0 0.0
  %1610 = vmatpush1.msra.mxu0 %v1595
  %1611 = vmatprep.subr.mxu0 0.0
  %1612 = vmatpush1.msra.mxu0 %v1597
  %1613 = vmatprep.subr.mxu0 0.0
  %1614 = vmatpush1.msra.mxu0 0.0
  %1615 = vmatprep.subr.mxu0 0.0
  %1616 = vmatpush1.msra.mxu0 0.0
  %1617 = vmatprep.subr.mxu0 0.0
  %1618 = vmatpush1.msra.mxu0 0.0
  %1619 = vmatprep.subr.mxu0 0.0
  %1620 = vmatpush1.msra.mxu0 0.0
  %1621 = vmatprep.subr.mxu0 0.0
  %1622 = vmatpush1.msra.mxu0 0.0
  %1623 = vmatprep.subr.mxu0 0.0
  %1624 = vmatpush1.msra.mxu0 0.0
  %1625 = vmatprep.subr.mxu0 0.0
  %1626 = vmatpush1.msra.mxu0 0.0
  %1627 = vmatprep.subr.mxu0 0.0
  %1628 = vmatpush1.msra.mxu0 0.0
  %1629 = vmatprep.subr.mxu0 0.0
  %1630 = vmatpush1.msra.mxu0 0.0
  %1631 = vmatprep.subr.mxu0 0.0
  %1632 = vmatpush1.msra.mxu0 0.0
  %1633 = vmatprep.subr.mxu0 0.0
  %1634 = vmatpush1.msra.mxu0 0.0
  %1635 = vmatprep.subr.mxu0 0.0
  %1636 = vmatpush1.msra.mxu0 0.0
  %1637 = vmatprep.subr.mxu0 0.0
  %1638 = vmatpush1.msra.mxu0 0.0
  %1639 = vmatprep.subr.mxu0 0.0
  %1640 = vmatpush1.msra.mxu0 0.0
  %1641 = vmatprep.subr.mxu0 0.0
  %1642 = vmatpush1.msra.mxu0 0.0
  %1643 = vmatprep.subr.mxu0 0.0
  %1644 = vmatpush1.msra.mxu0 0.0
  %1645 = vmatprep.subr.mxu0 0.0
  %1646 = vmatpush1.msra.mxu0 0.0
  %1647 = vmatprep.subr.mxu0 0.0
  %1648 = vmatpush1.msra.mxu0 0.0
  %1649 = vmatprep.subr.mxu0 0.0
  %1650 = vmatpush1.msra.mxu0 0.0
  %1651 = vmatprep.subr.mxu0 0.0
  %1652 = vmatpush1.msra.mxu0 0.0
  %1653 = vmatprep.subr.mxu0 0.0
  %1654 = vmatpush1.msra.mxu0 0.0
  %1655 = vmatprep.subr.mxu0 0.0
  %1656 = vmatpush1.msra.mxu0 0.0
  %1657 = vmatprep.subr.mxu0 0.0
  %1658 = vmatpush1.msra.mxu0 0.0
  %1659 = vmatprep.subr.mxu0 0.0
  %1660 = vmatpush1.msra.mxu0 0.0
  %1661 = vmatprep.subr.mxu0 0.0
  %1662 = vmatpush1.msra.mxu0 0.0
  %1663 = vmatprep.subr.mxu0 0.0
  %1664 = vmatpush1.msra.mxu0 0.0
  %1665 = vmatprep.subr.mxu0 0.0
  %1666 = vmatpush1.msra.mxu0 0.0
  %1667 = vmatprep.subr.mxu0 0.0
  %1668 = vmatpush1.msra.mxu0 0.0
  %1669 = vmatprep.mubr.f32.mxu0 0.0
  %1670 = vmatmul.mubr.f32.gmra.mrb[0].mxu0 %v1603
  %v1671 = vpop.f32.mrb[0].mxu0
  %v1672 = vadd.f32 0.0, %v1671
  %v1673 = vpop.f32.mrb[0].mxu0
  %1674 = vdwg.mxu0
  %1679 = vrot.lane.b32.xlu0 %v535, 64
  %v1680 = vpop.permute.xlu0 %1679
  %1681 = vrot.lane.b32.xlu0 %v536, 64
  %v1682 = vpop.permute.xlu0 %1681
  %1683 = vrot.lane.b32.xlu0 %v537, 64
  %v1684 = vpop.permute.xlu0 %1683
  %1685 = vrot.lane.b32.xlu0 %v538, 64
  %v1686 = vpop.permute.xlu0 %1685
  %v1692 = vsel %vm571, %v1491, 0
  %1694 = vmatprep.subr.mxu0 0.0
  %1695 = vmatpush1.msra.mxu0 %v1680
  %1696 = vmatprep.subr.mxu0 0.0
  %1697 = vmatpush1.msra.mxu0 %v1682
  %1698 = vmatprep.subr.mxu0 0.0
  %1699 = vmatpush1.msra.mxu0 %v1684
  %1700 = vmatprep.subr.mxu0 0.0
  %1701 = vmatpush1.msra.mxu0 %v1686
  %1702 = vmatprep.subr.mxu0 0.0
  %1703 = vmatpush1.msra.mxu0 0.0
  %1704 = vmatprep.subr.mxu0 0.0
  %1705 = vmatpush1.msra.mxu0 0.0
  %1706 = vmatprep.subr.mxu0 0.0
  %1707 = vmatpush1.msra.mxu0 0.0
  %1708 = vmatprep.subr.mxu0 0.0
  %1709 = vmatpush1.msra.mxu0 0.0
  %1710 = vmatprep.subr.mxu0 0.0
  %1711 = vmatpush1.msra.mxu0 0.0
  %1712 = vmatprep.subr.mxu0 0.0
  %1713 = vmatpush1.msra.mxu0 0.0
  %1714 = vmatprep.subr.mxu0 0.0
  %1715 = vmatpush1.msra.mxu0 0.0
  %1716 = vmatprep.subr.mxu0 0.0
  %1717 = vmatpush1.msra.mxu0 0.0
  %1718 = vmatprep.subr.mxu0 0.0
  %1719 = vmatpush1.msra.mxu0 0.0
  %1720 = vmatprep.subr.mxu0 0.0
  %1721 = vmatpush1.msra.mxu0 0.0
  %1722 = vmatprep.subr.mxu0 0.0
  %1723 = vmatpush1.msra.mxu0 0.0
  %1724 = vmatprep.subr.mxu0 0.0
  %1725 = vmatpush1.msra.mxu0 0.0
  %1726 = vmatprep.subr.mxu0 0.0
  %1727 = vmatpush1.msra.mxu0 0.0
  %1728 = vmatprep.subr.mxu0 0.0
  %1729 = vmatpush1.msra.mxu0 0.0
  %1730 = vmatprep.subr.mxu0 0.0
  %1731 = vmatpush1.msra.mxu0 0.0
  %1732 = vmatprep.subr.mxu0 0.0
  %1733 = vmatpush1.msra.mxu0 0.0
  %1734 = vmatprep.subr.mxu0 0.0
  %1735 = vmatpush1.msra.mxu0 0.0
  %1736 = vmatprep.subr.mxu0 0.0
  %1737 = vmatpush1.msra.mxu0 0.0
  %1738 = vmatprep.subr.mxu0 0.0
  %1739 = vmatpush1.msra.mxu0 0.0
  %1740 = vmatprep.subr.mxu0 0.0
  %1741 = vmatpush1.msra.mxu0 0.0
  %1742 = vmatprep.subr.mxu0 0.0
  %1743 = vmatpush1.msra.mxu0 0.0
  %1744 = vmatprep.subr.mxu0 0.0
  %1745 = vmatpush1.msra.mxu0 0.0
  %1746 = vmatprep.subr.mxu0 0.0
  %1747 = vmatpush1.msra.mxu0 0.0
  %1748 = vmatprep.subr.mxu0 0.0
  %1749 = vmatpush1.msra.mxu0 0.0
  %1750 = vmatprep.subr.mxu0 0.0
  %1751 = vmatpush1.msra.mxu0 0.0
  %1752 = vmatprep.subr.mxu0 0.0
  %1753 = vmatpush1.msra.mxu0 0.0
  %1754 = vmatprep.subr.mxu0 0.0
  %1755 = vmatpush1.msra.mxu0 0.0
  %1756 = vmatprep.subr.mxu0 0.0
  %1757 = vmatpush1.msra.mxu0 0.0
  %1758 = vmatprep.mubr.f32.mxu0 0.0
  %1759 = vmatmul.mubr.f32.gmra.mrb[0].mxu0 %v1692
  %v1760 = vpop.f32.mrb[0].mxu0
  %v1761 = vadd.f32 0.0, %v1760
  %v1762 = vpop.f32.mrb[0].mxu0
  %1763 = vdwg.mxu0
  %1768 = vrot.lane.b32.xlu0 %v539, 64
  %v1769 = vpop.permute.xlu0 %1768
  %1770 = vrot.lane.b32.xlu0 %v540, 64
  %v1771 = vpop.permute.xlu0 %1770
  %1772 = vrot.lane.b32.xlu0 %v541, 64
  %v1773 = vpop.permute.xlu0 %1772
  %1774 = vrot.lane.b32.xlu0 %v542, 64
  %v1775 = vpop.permute.xlu0 %1774
  %v1781 = vsel %vm571, %v1492, 0
  %1783 = vmatprep.subr.mxu0 0.0
  %1784 = vmatpush1.msra.mxu0 %v1769
  %1785 = vmatprep.subr.mxu0 0.0
  %1786 = vmatpush1.msra.mxu0 %v1771
  %1787 = vmatprep.subr.mxu0 0.0
  %1788 = vmatpush1.msra.mxu0 %v1773
  %1789 = vmatprep.subr.mxu0 0.0
  %1790 = vmatpush1.msra.mxu0 %v1775
  %1791 = vmatprep.subr.mxu0 0.0
  %1792 = vmatpush1.msra.mxu0 0.0
  %1793 = vmatprep.subr.mxu0 0.0
  %1794 = vmatpush1.msra.mxu0 0.0
  %1795 = vmatprep.subr.mxu0 0.0
  %1796 = vmatpush1.msra.mxu0 0.0
  %1797 = vmatprep.subr.mxu0 0.0
  %1798 = vmatpush1.msra.mxu0 0.0
  %1799 = vmatprep.subr.mxu0 0.0
  %1800 = vmatpush1.msra.mxu0 0.0
  %1801 = vmatprep.subr.mxu0 0.0
  %1802 = vmatpush1.msra.mxu0 0.0
  %1803 = vmatprep.subr.mxu0 0.0
  %1804 = vmatpush1.msra.mxu0 0.0
  %1805 = vmatprep.subr.mxu0 0.0
  %1806 = vmatpush1.msra.mxu0 0.0
  %1807 = vmatprep.subr.mxu0 0.0
  %1808 = vmatpush1.msra.mxu0 0.0
  %1809 = vmatprep.subr.mxu0 0.0
  %1810 = vmatpush1.msra.mxu0 0.0
  %1811 = vmatprep.subr.mxu0 0.0
  %1812 = vmatpush1.msra.mxu0 0.0
  %1813 = vmatprep.subr.mxu0 0.0
  %1814 = vmatpush1.msra.mxu0 0.0
  %1815 = vmatprep.subr.mxu0 0.0
  %1816 = vmatpush1.msra.mxu0 0.0
  %1817 = vmatprep.subr.mxu0 0.0
  %1818 = vmatpush1.msra.mxu0 0.0
  %1819 = vmatprep.subr.mxu0 0.0
  %1820 = vmatpush1.msra.mxu0 0.0
  %1821 = vmatprep.subr.mxu0 0.0
  %1822 = vmatpush1.msra.mxu0 0.0
  %1823 = vmatprep.subr.mxu0 0.0
  %1824 = vmatpush1.msra.mxu0 0.0
  %1825 = vmatprep.subr.mxu0 0.0
  %1826 = vmatpush1.msra.mxu0 0.0
  %1827 = vmatprep.subr.mxu0 0.0
  %1828 = vmatpush1.msra.mxu0 0.0
  %1829 = vmatprep.subr.mxu0 0.0
  %1830 = vmatpush1.msra.mxu0 0.0
  %1831 = vmatprep.subr.mxu0 0.0
  %1832 = vmatpush1.msra.mxu0 0.0
  %1833 = vmatprep.subr.mxu0 0.0
  %1834 = vmatpush1.msra.mxu0 0.0
  %1835 = vmatprep.subr.mxu0 0.0
  %1836 = vmatpush1.msra.mxu0 0.0
  %1837 = vmatprep.subr.mxu0 0.0
  %1838 = vmatpush1.msra.mxu0 0.0
  %1839 = vmatprep.subr.mxu0 0.0
  %1840 = vmatpush1.msra.mxu0 0.0
  %1841 = vmatprep.subr.mxu0 0.0
  %1842 = vmatpush1.msra.mxu0 0.0
  %1843 = vmatprep.subr.mxu0 0.0
  %1844 = vmatpush1.msra.mxu0 0.0
  %1845 = vmatprep.subr.mxu0 0.0
  %1846 = vmatpush1.msra.mxu0 0.0
  %1847 = vmatprep.mubr.f32.mxu0 0.0
  %1848 = vmatmul.mubr.f32.gmra.mrb[0].mxu0 %v1781
  %v1849 = vpop.f32.mrb[0].mxu0
  %v1850 = vadd.f32 0.0, %v1849
  %v1851 = vpop.f32.mrb[0].mxu0
  %1852 = vdwg.mxu0
  %1857 = vrot.lane.b32.xlu0 %v543, 64
  %v1858 = vpop.permute.xlu0 %1857
  %1859 = vrot.lane.b32.xlu0 %v544, 64
  %v1860 = vpop.permute.xlu0 %1859
  %1861 = vrot.lane.b32.xlu0 %v545, 64
  %v1862 = vpop.permute.xlu0 %1861
  %1863 = vrot.lane.b32.xlu0 %v546, 64
  %v1864 = vpop.permute.xlu0 %1863
  %v1870 = vsel %vm571, %v1493, 0
  %1872 = vmatprep.subr.mxu0 0.0
  %1873 = vmatpush1.msra.mxu0 %v1858
  %1874 = vmatprep.subr.mxu0 0.0
  %1875 = vmatpush1.msra.mxu0 %v1860
  %1876 = vmatprep.subr.mxu0 0.0
  %1877 = vmatpush1.msra.mxu0 %v1862
  %1878 = vmatprep.subr.mxu0 0.0
  %1879 = vmatpush1.msra.mxu0 %v1864
  %1880 = vmatprep.subr.mxu0 0.0
  %1881 = vmatpush1.msra.mxu0 0.0
  %1882 = vmatprep.subr.mxu0 0.0
  %1883 = vmatpush1.msra.mxu0 0.0
  %1884 = vmatprep.subr.mxu0 0.0
  %1885 = vmatpush1.msra.mxu0 0.0
  %1886 = vmatprep.subr.mxu0 0.0
  %1887 = vmatpush1.msra.mxu0 0.0
  %1888 = vmatprep.subr.mxu0 0.0
  %1889 = vmatpush1.msra.mxu0 0.0
  %1890 = vmatprep.subr.mxu0 0.0
  %1891 = vmatpush1.msra.mxu0 0.0
  %1892 = vmatprep.subr.mxu0 0.0
  %1893 = vmatpush1.msra.mxu0 0.0
  %1894 = vmatprep.subr.mxu0 0.0
  %1895 = vmatpush1.msra.mxu0 0.0
  %1896 = vmatprep.subr.mxu0 0.0
  %1897 = vmatpush1.msra.mxu0 0.0
  %1898 = vmatprep.subr.mxu0 0.0
  %1899 = vmatpush1.msra.mxu0 0.0
  %1900 = vmatprep.subr.mxu0 0.0
  %1901 = vmatpush1.msra.mxu0 0.0
  %1902 = vmatprep.subr.mxu0 0.0
  %1903 = vmatpush1.msra.mxu0 0.0
  %1904 = vmatprep.subr.mxu0 0.0
  %1905 = vmatpush1.msra.mxu0 0.0
  %1906 = vmatprep.subr.mxu0 0.0
  %1907 = vmatpush1.msra.mxu0 0.0
  %1908 = vmatprep.subr.mxu0 0.0
  %1909 = vmatpush1.msra.mxu0 0.0
  %1910 = vmatprep.subr.mxu0 0.0
  %1911 = vmatpush1.msra.mxu0 0.0
  %1912 = vmatprep.subr.mxu0 0.0
  %1913 = vmatpush1.msra.mxu0 0.0
  %1914 = vmatprep.subr.mxu0 0.0
  %1915 = vmatpush1.msra.mxu0 0.0
  %1916 = vmatprep.subr.mxu0 0.0
  %1917 = vmatpush1.msra.mxu0 0.0
  %1918 = vmatprep.subr.mxu0 0.0
  %1919 = vmatpush1.msra.mxu0 0.0
  %1920 = vmatprep.subr.mxu0 0.0
  %1921 = vmatpush1.msra.mxu0 0.0
  %1922 = vmatprep.subr.mxu0 0.0
  %1923 = vmatpush1.msra.mxu0 0.0
  %1924 = vmatprep.subr.mxu0 0.0
  %1925 = vmatpush1.msra.mxu0 0.0
  %1926 = vmatprep.subr.mxu0 0.0
  %1927 = vmatpush1.msra.mxu0 0.0
  %1928 = vmatprep.subr.mxu0 0.0
  %1929 = vmatpush1.msra.mxu0 0.0
  %1930 = vmatprep.subr.mxu0 0.0
  %1931 = vmatpush1.msra.mxu0 0.0
  %1932 = vmatprep.subr.mxu0 0.0
  %1933 = vmatpush1.msra.mxu0 0.0
  %1934 = vmatprep.subr.mxu0 0.0
  %1935 = vmatpush1.msra.mxu0 0.0
  %1936 = vmatprep.mubr.f32.mxu0 0.0
  %1937 = vmatmul.mubr.f32.gmra.mrb[0].mxu0 %v1870
  %v1938 = vpop.f32.mrb[0].mxu0
  %v1939 = vadd.f32 0.0, %v1938
  %v1940 = vpop.f32.mrb[0].mxu0
  %1941 = vdwg.mxu0
  %1946 = vrot.lane.b32.xlu0 %v547, 64
  %v1947 = vpop.permute.xlu0 %1946
  %1948 = vrot.lane.b32.xlu0 %v548, 64
  %v1949 = vpop.permute.xlu0 %1948
  %1950 = vrot.lane.b32.xlu0 %v549, 64
  %v1951 = vpop.permute.xlu0 %1950
  %1952 = vrot.lane.b32.xlu0 %v550, 64
  %v1953 = vpop.permute.xlu0 %1952
  %v1959 = vsel %vm571, %v1494, 0
  %1961 = vmatprep.subr.mxu0 0.0
  %1962 = vmatpush1.msra.mxu0 %v1947
  %1963 = vmatprep.subr.mxu0 0.0
  %1964 = vmatpush1.msra.mxu0 %v1949
  %1965 = vmatprep.subr.mxu0 0.0
  %1966 = vmatpush1.msra.mxu0 %v1951
  %1967 = vmatprep.subr.mxu0 0.0
  %1968 = vmatpush1.msra.mxu0 %v1953
  %1969 = vmatprep.subr.mxu0 0.0
  %1970 = vmatpush1.msra.mxu0 0.0
  %1971 = vmatprep.subr.mxu0 0.0
  %1972 = vmatpush1.msra.mxu0 0.0
  %1973 = vmatprep.subr.mxu0 0.0
  %1974 = vmatpush1.msra.mxu0 0.0
  %1975 = vmatprep.subr.mxu0 0.0
  %1976 = vmatpush1.msra.mxu0 0.0
  %1977 = vmatprep.subr.mxu0 0.0
  %1978 = vmatpush1.msra.mxu0 0.0
  %1979 = vmatprep.subr.mxu0 0.0
  %1980 = vmatpush1.msra.mxu0 0.0
  %1981 = vmatprep.subr.mxu0 0.0
  %1982 = vmatpush1.msra.mxu0 0.0
  %1983 = vmatprep.subr.mxu0 0.0
  %1984 = vmatpush1.msra.mxu0 0.0
  %1985 = vmatprep.subr.mxu0 0.0
  %1986 = vmatpush1.msra.mxu0 0.0
  %1987 = vmatprep.subr.mxu0 0.0
  %1988 = vmatpush1.msra.mxu0 0.0
  %1989 = vmatprep.subr.mxu0 0.0
  %1990 = vmatpush1.msra.mxu0 0.0
  %1991 = vmatprep.subr.mxu0 0.0
  %1992 = vmatpush1.msra.mxu0 0.0
  %1993 = vmatprep.subr.mxu0 0.0
  %1994 = vmatpush1.msra.mxu0 0.0
  %1995 = vmatprep.subr.mxu0 0.0
  %1996 = vmatpush1.msra.mxu0 0.0
  %1997 = vmatprep.subr.mxu0 0.0
  %1998 = vmatpush1.msra.mxu0 0.0
  %1999 = vmatprep.subr.mxu0 0.0
  %2000 = vmatpush1.msra.mxu0 0.0
  %2001 = vmatprep.subr.mxu0 0.0
  %2002 = vmatpush1.msra.mxu0 0.0
  %2003 = vmatprep.subr.mxu0 0.0
  %2004 = vmatpush1.msra.mxu0 0.0
  %2005 = vmatprep.subr.mxu0 0.0
  %2006 = vmatpush1.msra.mxu0 0.0
  %2007 = vmatprep.subr.mxu0 0.0
  %2008 = vmatpush1.msra.mxu0 0.0
  %2009 = vmatprep.subr.mxu0 0.0
  %2010 = vmatpush1.msra.mxu0 0.0
  %2011 = vmatprep.subr.mxu0 0.0
  %2012 = vmatpush1.msra.mxu0 0.0
  %2013 = vmatprep.subr.mxu0 0.0
  %2014 = vmatpush1.msra.mxu0 0.0
  %2015 = vmatprep.subr.mxu0 0.0
  %2016 = vmatpush1.msra.mxu0 0.0
  %2017 = vmatprep.subr.mxu0 0.0
  %2018 = vmatpush1.msra.mxu0 0.0
  %2019 = vmatprep.subr.mxu0 0.0
  %2020 = vmatpush1.msra.mxu0 0.0
  %2021 = vmatprep.subr.mxu0 0.0
  %2022 = vmatpush1.msra.mxu0 0.0
  %2023 = vmatprep.subr.mxu0 0.0
  %2024 = vmatpush1.msra.mxu0 0.0
  %2025 = vmatprep.mubr.f32.mxu0 0.0
  %2026 = vmatmul.mubr.f32.gmra.mrb[0].mxu0 %v1959
  %v2027 = vpop.f32.mrb[0].mxu0
  %v2028 = vadd.f32 0.0, %v2027
  %v2029 = vpop.f32.mrb[0].mxu0
  %2030 = vdwg.mxu0
  %2035 = vrot.lane.b32.xlu0 %v551, 64
  %v2036 = vpop.permute.xlu0 %2035
  %2037 = vrot.lane.b32.xlu0 %v552, 64
  %v2038 = vpop.permute.xlu0 %2037
  %2039 = vrot.lane.b32.xlu0 %v553, 64
  %v2040 = vpop.permute.xlu0 %2039
  %2041 = vrot.lane.b32.xlu0 %v554, 64
  %v2042 = vpop.permute.xlu0 %2041
  %v2048 = vsel %vm571, %v1495, 0
  %2050 = vmatprep.subr.mxu0 0.0
  %2051 = vmatpush1.msra.mxu0 %v2036
  %2052 = vmatprep.subr.mxu0 0.0
  %2053 = vmatpush1.msra.mxu0 %v2038
  %2054 = vmatprep.subr.mxu0 0.0
  %2055 = vmatpush1.msra.mxu0 %v2040
  %2056 = vmatprep.subr.mxu0 0.0
  %2057 = vmatpush1.msra.mxu0 %v2042
  %2058 = vmatprep.subr.mxu0 0.0
  %2059 = vmatpush1.msra.mxu0 0.0
  %2060 = vmatprep.subr.mxu0 0.0
  %2061 = vmatpush1.msra.mxu0 0.0
  %2062 = vmatprep.subr.mxu0 0.0
  %2063 = vmatpush1.msra.mxu0 0.0
  %2064 = vmatprep.subr.mxu0 0.0
  %2065 = vmatpush1.msra.mxu0 0.0
  %2066 = vmatprep.subr.mxu0 0.0
  %2067 = vmatpush1.msra.mxu0 0.0
  %2068 = vmatprep.subr.mxu0 0.0
  %2069 = vmatpush1.msra.mxu0 0.0
  %2070 = vmatprep.subr.mxu0 0.0
  %2071 = vmatpush1.msra.mxu0 0.0
  %2072 = vmatprep.subr.mxu0 0.0
  %2073 = vmatpush1.msra.mxu0 0.0
  %2074 = vmatprep.subr.mxu0 0.0
  %2075 = vmatpush1.msra.mxu0 0.0
  %2076 = vmatprep.subr.mxu0 0.0
  %2077 = vmatpush1.msra.mxu0 0.0
  %2078 = vmatprep.subr.mxu0 0.0
  %2079 = vmatpush1.msra.mxu0 0.0
  %2080 = vmatprep.subr.mxu0 0.0
  %2081 = vmatpush1.msra.mxu0 0.0
  %2082 = vmatprep.subr.mxu0 0.0
  %2083 = vmatpush1.msra.mxu0 0.0
  %2084 = vmatprep.subr.mxu0 0.0
  %2085 = vmatpush1.msra.mxu0 0.0
  %2086 = vmatprep.subr.mxu0 0.0
  %2087 = vmatpush1.msra.mxu0 0.0
  %2088 = vmatprep.subr.mxu0 0.0
  %2089 = vmatpush1.msra.mxu0 0.0
  %2090 = vmatprep.subr.mxu0 0.0
  %2091 = vmatpush1.msra.mxu0 0.0
  %2092 = vmatprep.subr.mxu0 0.0
  %2093 = vmatpush1.msra.mxu0 0.0
  %2094 = vmatprep.subr.mxu0 0.0
  %2095 = vmatpush1.msra.mxu0 0.0
  %2096 = vmatprep.subr.mxu0 0.0
  %2097 = vmatpush1.msra.mxu0 0.0
  %2098 = vmatprep.subr.mxu0 0.0
  %2099 = vmatpush1.msra.mxu0 0.0
  %2100 = vmatprep.subr.mxu0 0.0
  %2101 = vmatpush1.msra.mxu0 0.0
  %2102 = vmatprep.subr.mxu0 0.0
  %2103 = vmatpush1.msra.mxu0 0.0
  %2104 = vmatprep.subr.mxu0 0.0
  %2105 = vmatpush1.msra.mxu0 0.0
  %2106 = vmatprep.subr.mxu0 0.0
  %2107 = vmatpush1.msra.mxu0 0.0
  %2108 = vmatprep.subr.mxu0 0.0
  %2109 = vmatpush1.msra.mxu0 0.0
  %2110 = vmatprep.subr.mxu0 0.0
  %2111 = vmatpush1.msra.mxu0 0.0
  %2112 = vmatprep.subr.mxu0 0.0
  %2113 = vmatpush1.msra.mxu0 0.0
  %2114 = vmatprep.mubr.f32.mxu0 0.0
  %2115 = vmatmul.mubr.f32.gmra.mrb[0].mxu0 %v2048
  %v2116 = vpop.f32.mrb[0].mxu0
  %v2117 = vadd.f32 0.0, %v2116
  %v2118 = vpop.f32.mrb[0].mxu0
  %2119 = vdwg.mxu0
  %2124 = vrot.lane.b32.xlu0 %v555, 64
  %v2125 = vpop.permute.xlu0 %2124
  %2126 = vrot.lane.b32.xlu0 %v556, 64
  %v2127 = vpop.permute.xlu0 %2126
  %2128 = vrot.lane.b32.xlu0 %v557, 64
  %v2129 = vpop.permute.xlu0 %2128
  %2130 = vrot.lane.b32.xlu0 %v558, 64
  %v2131 = vpop.permute.xlu0 %2130
  %v2137 = vsel %vm571, %v1496, 0
  %2139 = vmatprep.subr.mxu0 0.0
  %2140 = vmatpush1.msra.mxu0 %v2125
  %2141 = vmatprep.subr.mxu0 0.0
  %2142 = vmatpush1.msra.mxu0 %v2127
  %2143 = vmatprep.subr.mxu0 0.0
  %2144 = vmatpush1.msra.mxu0 %v2129
  %2145 = vmatprep.subr.mxu0 0.0
  %2146 = vmatpush1.msra.mxu0 %v2131
  %2147 = vmatprep.subr.mxu0 0.0
  %2148 = vmatpush1.msra.mxu0 0.0
  %2149 = vmatprep.subr.mxu0 0.0
  %2150 = vmatpush1.msra.mxu0 0.0
  %2151 = vmatprep.subr.mxu0 0.0
  %2152 = vmatpush1.msra.mxu0 0.0
  %2153 = vmatprep.subr.mxu0 0.0
  %2154 = vmatpush1.msra.mxu0 0.0
  %2155 = vmatprep.subr.mxu0 0.0
  %2156 = vmatpush1.msra.mxu0 0.0
  %2157 = vmatprep.subr.mxu0 0.0
  %2158 = vmatpush1.msra.mxu0 0.0
  %2159 = vmatprep.subr.mxu0 0.0
  %2160 = vmatpush1.msra.mxu0 0.0
  %2161 = vmatprep.subr.mxu0 0.0
  %2162 = vmatpush1.msra.mxu0 0.0
  %2163 = vmatprep.subr.mxu0 0.0
  %2164 = vmatpush1.msra.mxu0 0.0
  %2165 = vmatprep.subr.mxu0 0.0
  %2166 = vmatpush1.msra.mxu0 0.0
  %2167 = vmatprep.subr.mxu0 0.0
  %2168 = vmatpush1.msra.mxu0 0.0
  %2169 = vmatprep.subr.mxu0 0.0
  %2170 = vmatpush1.msra.mxu0 0.0
  %2171 = vmatprep.subr.mxu0 0.0
  %2172 = vmatpush1.msra.mxu0 0.0
  %2173 = vmatprep.subr.mxu0 0.0
  %2174 = vmatpush1.msra.mxu0 0.0
  %2175 = vmatprep.subr.mxu0 0.0
  %2176 = vmatpush1.msra.mxu0 0.0
  %2177 = vmatprep.subr.mxu0 0.0
  %2178 = vmatpush1.msra.mxu0 0.0
  %2179 = vmatprep.subr.mxu0 0.0
  %2180 = vmatpush1.msra.mxu0 0.0
  %2181 = vmatprep.subr.mxu0 0.0
  %2182 = vmatpush1.msra.mxu0 0.0
  %2183 = vmatprep.subr.mxu0 0.0
  %2184 = vmatpush1.msra.mxu0 0.0
  %2185 = vmatprep.subr.mxu0 0.0
  %2186 = vmatpush1.msra.mxu0 0.0
  %2187 = vmatprep.subr.mxu0 0.0
  %2188 = vmatpush1.msra.mxu0 0.0
  %2189 = vmatprep.subr.mxu0 0.0
  %2190 = vmatpush1.msra.mxu0 0.0
  %2191 = vmatprep.subr.mxu0 0.0
  %2192 = vmatpush1.msra.mxu0 0.0
  %2193 = vmatprep.subr.mxu0 0.0
  %2194 = vmatpush1.msra.mxu0 0.0
  %2195 = vmatprep.subr.mxu0 0.0
  %2196 = vmatpush1.msra.mxu0 0.0
  %2197 = vmatprep.subr.mxu0 0.0
  %2198 = vmatpush1.msra.mxu0 0.0
  %2199 = vmatprep.subr.mxu0 0.0
  %2200 = vmatpush1.msra.mxu0 0.0
  %2201 = vmatprep.subr.mxu0 0.0
  %2202 = vmatpush1.msra.mxu0 0.0
  %2203 = vmatprep.mubr.f32.mxu0 0.0
  %2204 = vmatmul.mubr.f32.gmra.mrb[0].mxu0 %v2137
  %v2205 = vpop.f32.mrb[0].mxu0
  %v2206 = vadd.f32 0.0, %v2205
  %v2207 = vpop.f32.mrb[0].mxu0
  %2208 = vdwg.mxu0
  %v2210 = vlaneseq
  %v2211 = vshrl.u32 %v2210, 7
  %v2212 = vsub.s32 0, %v2211
  %v2213 = vrot.slane %v41, %v2212
  %v2216 = vsel %vm571, %v1583, 0
  %v2219 = vsel %vm571, %v1672, 0
  %v2222 = vsel %vm571, %v1761, 0
  %v2225 = vsel %vm571, %v1850, 0
  %v2228 = vsel %vm571, %v1939, 0
  %v2231 = vsel %vm571, %v2028, 0
  %v2234 = vsel %vm571, %v2117, 0
  %v2237 = vsel %vm571, %v2206, 0
  %2239 = vmatprep.subr.mxu0 0.0
  %2240 = vmatpush1.msra.mxu0 %v37
  %2241 = vmatprep.subr.mxu0 0.0
  %2242 = vmatpush1.msra.mxu0 %v38
  %2243 = vmatprep.subr.mxu0 0.0
  %2244 = vmatpush1.msra.mxu0 %v39
  %2245 = vmatprep.subr.mxu0 0.0
  %2246 = vmatpush1.msra.mxu0 %v40
  %2247 = vmatprep.subr.mxu0 0.0
  %2248 = vmatpush1.msra.mxu0 0.0
  %2249 = vmatprep.subr.mxu0 0.0
  %2250 = vmatpush1.msra.mxu0 0.0
  %2251 = vmatprep.subr.mxu0 0.0
  %2252 = vmatpush1.msra.mxu0 0.0
  %2253 = vmatprep.subr.mxu0 0.0
  %2254 = vmatpush1.msra.mxu0 0.0
  %2255 = vmatprep.subr.mxu0 0.0
  %2256 = vmatpush1.msra.mxu0 0.0
  %2257 = vmatprep.subr.mxu0 0.0
  %2258 = vmatpush1.msra.mxu0 0.0
  %2259 = vmatprep.subr.mxu0 0.0
  %2260 = vmatpush1.msra.mxu0 0.0
  %2261 = vmatprep.subr.mxu0 0.0
  %2262 = vmatpush1.msra.mxu0 0.0
  %2263 = vmatprep.subr.mxu0 0.0
  %2264 = vmatpush1.msra.mxu0 0.0
  %2265 = vmatprep.subr.mxu0 0.0
  %2266 = vmatpush1.msra.mxu0 0.0
  %2267 = vmatprep.subr.mxu0 0.0
  %2268 = vmatpush1.msra.mxu0 0.0
  %2269 = vmatprep.subr.mxu0 0.0
  %2270 = vmatpush1.msra.mxu0 0.0
  %2271 = vmatprep.subr.mxu0 0.0
  %2272 = vmatpush1.msra.mxu0 0.0
  %2273 = vmatprep.subr.mxu0 0.0
  %2274 = vmatpush1.msra.mxu0 0.0
  %2275 = vmatprep.subr.mxu0 0.0
  %2276 = vmatpush1.msra.mxu0 0.0
  %2277 = vmatprep.subr.mxu0 0.0
  %2278 = vmatpush1.msra.mxu0 0.0
  %2279 = vmatprep.subr.mxu0 0.0
  %2280 = vmatpush1.msra.mxu0 0.0
  %2281 = vmatprep.subr.mxu0 0.0
  %2282 = vmatpush1.msra.mxu0 0.0
  %2283 = vmatprep.subr.mxu0 0.0
  %2284 = vmatpush1.msra.mxu0 0.0
  %2285 = vmatprep.subr.mxu0 0.0
  %2286 = vmatpush1.msra.mxu0 0.0
  %2287 = vmatprep.subr.mxu0 0.0
  %2288 = vmatpush1.msra.mxu0 0.0
  %2289 = vmatprep.subr.mxu0 0.0
  %2290 = vmatpush1.msra.mxu0 0.0
  %2291 = vmatprep.subr.mxu0 0.0
  %2292 = vmatpush1.msra.mxu0 0.0
  %2293 = vmatprep.subr.mxu0 0.0
  %2294 = vmatpush1.msra.mxu0 0.0
  %2295 = vmatprep.subr.mxu0 0.0
  %2296 = vmatpush1.msra.mxu0 0.0
  %2297 = vmatprep.subr.mxu0 0.0
  %2298 = vmatpush1.msra.mxu0 0.0
  %2299 = vmatprep.subr.mxu0 0.0
  %2300 = vmatpush1.msra.mxu0 0.0
  %2301 = vmatprep.subr.mxu0 0.0
  %2302 = vmatpush1.msra.mxu0 0.0
  %2303 = vmatprep.mubr.f32.mxu0 0.0
  %2304 = vmatmul.mubr.f32.gmra.mrb[0].mxu0 %v2216
  %v2305 = vpop.f32.mrb[0].mxu0
  %v2306 = vadd.f32 %v2213, %v2305
  %v2307 = vpop.f32.mrb[0].mxu0
  %2308 = vmatprep.mubr.f32.mxu0 0.0
  %2309 = vmatmul.mubr.f32.gmra.mrb[0].mxu0 %v2219
  %v2310 = vpop.f32.mrb[0].mxu0
  %v2311 = vadd.f32 %v2213, %v2310
  %v2312 = vpop.f32.mrb[0].mxu0
  %2313 = vmatprep.mubr.f32.mxu0 0.0
  %2314 = vmatmul.mubr.f32.gmra.mrb[0].mxu0 %v2222
  %v2315 = vpop.f32.mrb[0].mxu0
  %v2316 = vadd.f32 %v2213, %v2315
  %v2317 = vpop.f32.mrb[0].mxu0
  %2318 = vmatprep.mubr.f32.mxu0 0.0
  %2319 = vmatmul.mubr.f32.gmra.mrb[0].mxu0 %v2225
  %v2320 = vpop.f32.mrb[0].mxu0
  %v2321 = vadd.f32 %v2213, %v2320
  %v2322 = vpop.f32.mrb[0].mxu0
  %2323 = vmatprep.mubr.f32.mxu0 0.0
  %2324 = vmatmul.mubr.f32.gmra.mrb[0].mxu0 %v2228
  %v2325 = vpop.f32.mrb[0].mxu0
  %v2326 = vadd.f32 %v2213, %v2325
  %v2327 = vpop.f32.mrb[0].mxu0
  %2328 = vmatprep.mubr.f32.mxu0 0.0
  %2329 = vmatmul.mubr.f32.gmra.mrb[0].mxu0 %v2231
  %v2330 = vpop.f32.mrb[0].mxu0
  %v2331 = vadd.f32 %v2213, %v2330
  %v2332 = vpop.f32.mrb[0].mxu0
  %2333 = vmatprep.mubr.f32.mxu0 0.0
  %2334 = vmatmul.mubr.f32.gmra.mrb[0].mxu0 %v2234
  %v2335 = vpop.f32.mrb[0].mxu0
  %v2336 = vadd.f32 %v2213, %v2335
  %v2337 = vpop.f32.mrb[0].mxu0
  %2338 = vmatprep.mubr.f32.mxu0 0.0
  %2339 = vmatmul.mubr.f32.gmra.mrb[0].mxu0 %v2237
  %v2340 = vpop.f32.mrb[0].mxu0
  %v2341 = vadd.f32 %v2213, %v2340
  %v2342 = vpop.f32.mrb[0].mxu0
  %2343 = vdwg.mxu0
  %2344 = vxpose.xlu0.b32.start [1/16] %v2306, 128
  %2345 = vxpose.xlu0.b32.cont [2/16] 0.0, 128
  %2346 = vxpose.xlu0.b32.cont [3/16] 0.0, 128
  %2347 = vxpose.xlu0.b32.cont [4/16] 0.0, 128
  %2348 = vxpose.xlu0.b32.cont [5/16] 0.0, 128
  %2349 = vxpose.xlu0.b32.cont [6/16] 0.0, 128
  %2350 = vxpose.xlu0.b32.cont [7/16] 0.0, 128
  %2351 = vxpose.xlu0.b32.cont [8/16] 0.0, 128
  %2352 = vxpose.xlu0.b32.cont [9/16] 0.0, 128
  %2353 = vxpose.xlu0.b32.cont [10/16] 0.0, 128
  %2354 = vxpose.xlu0.b32.cont [11/16] 0.0, 128
  %2355 = vxpose.xlu0.b32.cont [12/16] 0.0, 128
  %2356 = vxpose.xlu0.b32.cont [13/16] 0.0, 128
  %2357 = vxpose.xlu0.b32.cont [14/16] 0.0, 128
  %2358 = vxpose.xlu0.b32.cont [15/16] 0.0, 128
  %2359 = vxpose.xlu0.b32.end [16/16] 0.0, 128
  %v2360 = vpop.trf.xlu0
  %v2361 = vpop.trf.xlu0
  %v2362 = vpop.trf.xlu0
  %v2363 = vpop.trf.xlu0
  %v2364 = vpop.trf.xlu0
  %v2365 = vpop.trf.xlu0
  %v2366 = vpop.trf.xlu0
  %v2367 = vpop.trf.xlu0
  %v2368 = vpop.trf.xlu0
  %v2369 = vpop.trf.xlu0
  %v2370 = vpop.trf.xlu0
  %v2371 = vpop.trf.xlu0
  %v2372 = vpop.trf.xlu0
  %v2373 = vpop.trf.xlu0
  %v2374 = vpop.trf.xlu0
  %v2375 = vpop.trf.xlu0
  %2376 = vxpose.xlu0.b32.start [1/16] %v2311, 128
  %2377 = vxpose.xlu0.b32.cont [2/16] 0.0, 128
  %2378 = vxpose.xlu0.b32.cont [3/16] 0.0, 128
  %2379 = vxpose.xlu0.b32.cont [4/16] 0.0, 128
  %2380 = vxpose.xlu0.b32.cont [5/16] 0.0, 128
  %2381 = vxpose.xlu0.b32.cont [6/16] 0.0, 128
  %2382 = vxpose.xlu0.b32.cont [7/16] 0.0, 128
  %2383 = vxpose.xlu0.b32.cont [8/16] 0.0, 128
  %2384 = vxpose.xlu0.b32.cont [9/16] 0.0, 128
  %2385 = vxpose.xlu0.b32.cont [10/16] 0.0, 128
  %2386 = vxpose.xlu0.b32.cont [11/16] 0.0, 128
  %2387 = vxpose.xlu0.b32.cont [12/16] 0.0, 128
  %2388 = vxpose.xlu0.b32.cont [13/16] 0.0, 128
  %2389 = vxpose.xlu0.b32.cont [14/16] 0.0, 128
  %2390 = vxpose.xlu0.b32.cont [15/16] 0.0, 128
  %2391 = vxpose.xlu0.b32.end [16/16] 0.0, 128
  %v2392 = vpop.trf.xlu0
  %v2393 = vpop.trf.xlu0
  %v2394 = vpop.trf.xlu0
  %v2395 = vpop.trf.xlu0
  %v2396 = vpop.trf.xlu0
  %v2397 = vpop.trf.xlu0
  %v2398 = vpop.trf.xlu0
  %v2399 = vpop.trf.xlu0
  %v2400 = vpop.trf.xlu0
  %v2401 = vpop.trf.xlu0
  %v2402 = vpop.trf.xlu0
  %v2403 = vpop.trf.xlu0
  %v2404 = vpop.trf.xlu0
  %v2405 = vpop.trf.xlu0
  %v2406 = vpop.trf.xlu0
  %v2407 = vpop.trf.xlu0
  %2408 = vxpose.xlu0.b32.start [1/16] %v2316, 128
  %2409 = vxpose.xlu0.b32.cont [2/16] 0.0, 128
  %2410 = vxpose.xlu0.b32.cont [3/16] 0.0, 128
  %2411 = vxpose.xlu0.b32.cont [4/16] 0.0, 128
  %2412 = vxpose.xlu0.b32.cont [5/16] 0.0, 128
  %2413 = vxpose.xlu0.b32.cont [6/16] 0.0, 128
  %2414 = vxpose.xlu0.b32.cont [7/16] 0.0, 128
  %2415 = vxpose.xlu0.b32.cont [8/16] 0.0, 128
  %2416 = vxpose.xlu0.b32.cont [9/16] 0.0, 128
  %2417 = vxpose.xlu0.b32.cont [10/16] 0.0, 128
  %2418 = vxpose.xlu0.b32.cont [11/16] 0.0, 128
  %2419 = vxpose.xlu0.b32.cont [12/16] 0.0, 128
  %2420 = vxpose.xlu0.b32.cont [13/16] 0.0, 128
  %2421 = vxpose.xlu0.b32.cont [14/16] 0.0, 128
  %2422 = vxpose.xlu0.b32.cont [15/16] 0.0, 128
  %2423 = vxpose.xlu0.b32.end [16/16] 0.0, 128
  %v2424 = vpop.trf.xlu0
  %v2425 = vpop.trf.xlu0
  %v2426 = vpop.trf.xlu0
  %v2427 = vpop.trf.xlu0
  %v2428 = vpop.trf.xlu0
  %v2429 = vpop.trf.xlu0
  %v2430 = vpop.trf.xlu0
  %v2431 = vpop.trf.xlu0
  %v2432 = vpop.trf.xlu0
  %v2433 = vpop.trf.xlu0
  %v2434 = vpop.trf.xlu0
  %v2435 = vpop.trf.xlu0
  %v2436 = vpop.trf.xlu0
  %v2437 = vpop.trf.xlu0
  %v2438 = vpop.trf.xlu0
  %v2439 = vpop.trf.xlu0
  %2440 = vxpose.xlu0.b32.start [1/16] %v2321, 128
  %2441 = vxpose.xlu0.b32.cont [2/16] 0.0, 128
  %2442 = vxpose.xlu0.b32.cont [3/16] 0.0, 128
  %2443 = vxpose.xlu0.b32.cont [4/16] 0.0, 128
  %2444 = vxpose.xlu0.b32.cont [5/16] 0.0, 128
  %2445 = vxpose.xlu0.b32.cont [6/16] 0.0, 128
  %2446 = vxpose.xlu0.b32.cont [7/16] 0.0, 128
  %2447 = vxpose.xlu0.b32.cont [8/16] 0.0, 128
  %2448 = vxpose.xlu0.b32.cont [9/16] 0.0, 128
  %2449 = vxpose.xlu0.b32.cont [10/16] 0.0, 128
  %2450 = vxpose.xlu0.b32.cont [11/16] 0.0, 128
  %2451 = vxpose.xlu0.b32.cont [12/16] 0.0, 128
  %2452 = vxpose.xlu0.b32.cont [13/16] 0.0, 128
  %2453 = vxpose.xlu0.b32.cont [14/16] 0.0, 128
  %2454 = vxpose.xlu0.b32.cont [15/16] 0.0, 128
  %2455 = vxpose.xlu0.b32.end [16/16] 0.0, 128
  %v2456 = vpop.trf.xlu0
  %v2457 = vpop.trf.xlu0
  %v2458 = vpop.trf.xlu0
  %v2459 = vpop.trf.xlu0
  %v2460 = vpop.trf.xlu0
  %v2461 = vpop.trf.xlu0
  %v2462 = vpop.trf.xlu0
  %v2463 = vpop.trf.xlu0
  %v2464 = vpop.trf.xlu0
  %v2465 = vpop.trf.xlu0
  %v2466 = vpop.trf.xlu0
  %v2467 = vpop.trf.xlu0
  %v2468 = vpop.trf.xlu0
  %v2469 = vpop.trf.xlu0
  %v2470 = vpop.trf.xlu0
  %v2471 = vpop.trf.xlu0
  %2472 = vxpose.xlu0.b32.start [1/16] %v2326, 128
  %2473 = vxpose.xlu0.b32.cont [2/16] 0.0, 128
  %2474 = vxpose.xlu0.b32.cont [3/16] 0.0, 128
  %2475 = vxpose.xlu0.b32.cont [4/16] 0.0, 128
  %2476 = vxpose.xlu0.b32.cont [5/16] 0.0, 128
  %2477 = vxpose.xlu0.b32.cont [6/16] 0.0, 128
  %2478 = vxpose.xlu0.b32.cont [7/16] 0.0, 128
  %2479 = vxpose.xlu0.b32.cont [8/16] 0.0, 128
  %2480 = vxpose.xlu0.b32.cont [9/16] 0.0, 128
  %2481 = vxpose.xlu0.b32.cont [10/16] 0.0, 128
  %2482 = vxpose.xlu0.b32.cont [11/16] 0.0, 128
  %2483 = vxpose.xlu0.b32.cont [12/16] 0.0, 128
  %2484 = vxpose.xlu0.b32.cont [13/16] 0.0, 128
  %2485 = vxpose.xlu0.b32.cont [14/16] 0.0, 128
  %2486 = vxpose.xlu0.b32.cont [15/16] 0.0, 128
  %2487 = vxpose.xlu0.b32.end [16/16] 0.0, 128
  %v2488 = vpop.trf.xlu0
  %v2489 = vpop.trf.xlu0
  %v2490 = vpop.trf.xlu0
  %v2491 = vpop.trf.xlu0
  %v2492 = vpop.trf.xlu0
  %v2493 = vpop.trf.xlu0
  %v2494 = vpop.trf.xlu0
  %v2495 = vpop.trf.xlu0
  %v2496 = vpop.trf.xlu0
  %v2497 = vpop.trf.xlu0
  %v2498 = vpop.trf.xlu0
  %v2499 = vpop.trf.xlu0
  %v2500 = vpop.trf.xlu0
  %v2501 = vpop.trf.xlu0
  %v2502 = vpop.trf.xlu0
  %v2503 = vpop.trf.xlu0
  %2504 = vxpose.xlu0.b32.start [1/16] %v2331, 128
  %2505 = vxpose.xlu0.b32.cont [2/16] 0.0, 128
  %2506 = vxpose.xlu0.b32.cont [3/16] 0.0, 128
  %2507 = vxpose.xlu0.b32.cont [4/16] 0.0, 128
  %2508 = vxpose.xlu0.b32.cont [5/16] 0.0, 128
  %2509 = vxpose.xlu0.b32.cont [6/16] 0.0, 128
  %2510 = vxpose.xlu0.b32.cont [7/16] 0.0, 128
  %2511 = vxpose.xlu0.b32.cont [8/16] 0.0, 128
  %2512 = vxpose.xlu0.b32.cont [9/16] 0.0, 128
  %2513 = vxpose.xlu0.b32.cont [10/16] 0.0, 128
  %2514 = vxpose.xlu0.b32.cont [11/16] 0.0, 128
  %2515 = vxpose.xlu0.b32.cont [12/16] 0.0, 128
  %2516 = vxpose.xlu0.b32.cont [13/16] 0.0, 128
  %2517 = vxpose.xlu0.b32.cont [14/16] 0.0, 128
  %2518 = vxpose.xlu0.b32.cont [15/16] 0.0, 128
  %2519 = vxpose.xlu0.b32.end [16/16] 0.0, 128
  %v2520 = vpop.trf.xlu0
  %v2521 = vpop.trf.xlu0
  %v2522 = vpop.trf.xlu0
  %v2523 = vpop.trf.xlu0
  %v2524 = vpop.trf.xlu0
  %v2525 = vpop.trf.xlu0
  %v2526 = vpop.trf.xlu0
  %v2527 = vpop.trf.xlu0
  %v2528 = vpop.trf.xlu0
  %v2529 = vpop.trf.xlu0
  %v2530 = vpop.trf.xlu0
  %v2531 = vpop.trf.xlu0
  %v2532 = vpop.trf.xlu0
  %v2533 = vpop.trf.xlu0
  %v2534 = vpop.trf.xlu0
  %v2535 = vpop.trf.xlu0
  %2536 = vxpose.xlu0.b32.start [1/16] %v2336, 128
  %2537 = vxpose.xlu0.b32.cont [2/16] 0.0, 128
  %2538 = vxpose.xlu0.b32.cont [3/16] 0.0, 128
  %2539 = vxpose.xlu0.b32.cont [4/16] 0.0, 128
  %2540 = vxpose.xlu0.b32.cont [5/16] 0.0, 128
  %2541 = vxpose.xlu0.b32.cont [6/16] 0.0, 128
  %2542 = vxpose.xlu0.b32.cont [7/16] 0.0, 128
  %2543 = vxpose.xlu0.b32.cont [8/16] 0.0, 128
  %2544 = vxpose.xlu0.b32.cont [9/16] 0.0, 128
  %2545 = vxpose.xlu0.b32.cont [10/16] 0.0, 128
  %2546 = vxpose.xlu0.b32.cont [11/16] 0.0, 128
  %2547 = vxpose.xlu0.b32.cont [12/16] 0.0, 128
  %2548 = vxpose.xlu0.b32.cont [13/16] 0.0, 128
  %2549 = vxpose.xlu0.b32.cont [14/16] 0.0, 128
  %2550 = vxpose.xlu0.b32.cont [15/16] 0.0, 128
  %2551 = vxpose.xlu0.b32.end [16/16] 0.0, 128
  %v2552 = vpop.trf.xlu0
  %v2553 = vpop.trf.xlu0
  %v2554 = vpop.trf.xlu0
  %v2555 = vpop.trf.xlu0
  %v2556 = vpop.trf.xlu0
  %v2557 = vpop.trf.xlu0
  %v2558 = vpop.trf.xlu0
  %v2559 = vpop.trf.xlu0
  %v2560 = vpop.trf.xlu0
  %v2561 = vpop.trf.xlu0
  %v2562 = vpop.trf.xlu0
  %v2563 = vpop.trf.xlu0
  %v2564 = vpop.trf.xlu0
  %v2565 = vpop.trf.xlu0
  %v2566 = vpop.trf.xlu0
  %v2567 = vpop.trf.xlu0
  %2568 = vxpose.xlu0.b32.start [1/16] %v2341, 128
  %2569 = vxpose.xlu0.b32.cont [2/16] 0.0, 128
  %2570 = vxpose.xlu0.b32.cont [3/16] 0.0, 128
  %2571 = vxpose.xlu0.b32.cont [4/16] 0.0, 128
  %2572 = vxpose.xlu0.b32.cont [5/16] 0.0, 128
  %2573 = vxpose.xlu0.b32.cont [6/16] 0.0, 128
  %2574 = vxpose.xlu0.b32.cont [7/16] 0.0, 128
  %2575 = vxpose.xlu0.b32.cont [8/16] 0.0, 128
  %2576 = vxpose.xlu0.b32.cont [9/16] 0.0, 128
  %2577 = vxpose.xlu0.b32.cont [10/16] 0.0, 128
  %2578 = vxpose.xlu0.b32.cont [11/16] 0.0, 128
  %2579 = vxpose.xlu0.b32.cont [12/16] 0.0, 128
  %2580 = vxpose.xlu0.b32.cont [13/16] 0.0, 128
  %2581 = vxpose.xlu0.b32.cont [14/16] 0.0, 128
  %2582 = vxpose.xlu0.b32.cont [15/16] 0.0, 128
  %2583 = vxpose.xlu0.b32.end [16/16] 0.0, 128
  %v2584 = vpop.trf.xlu0
  %v2585 = vpop.trf.xlu0
  %v2586 = vpop.trf.xlu0
  %v2587 = vpop.trf.xlu0
  %v2588 = vpop.trf.xlu0
  %v2589 = vpop.trf.xlu0
  %v2590 = vpop.trf.xlu0
  %v2591 = vpop.trf.xlu0
  %v2592 = vpop.trf.xlu0
  %v2593 = vpop.trf.xlu0
  %v2594 = vpop.trf.xlu0
  %v2595 = vpop.trf.xlu0
  %v2596 = vpop.trf.xlu0
  %v2597 = vpop.trf.xlu0
  %v2598 = vpop.trf.xlu0
  %v2599 = vpop.trf.xlu0
  %vm2600 = vcmask 64512
  %2601 = vst.msk [vmem:[%s7] sm:$0xff] %vm2600, %v2360
  %2602 = vst.msk [vmem:[%s7 + $0x8] sm:$0xff] %vm2600, %v2361
  %2603 = vst.msk [vmem:[%s7 + $0x10] sm:$0xff] %vm2600, %v2362
  %2604 = vst.msk [vmem:[%s7 + $0x18] sm:$0xff] %vm2600, %v2363
  %2605 = vst.msk [vmem:[%s7 + $0x20] sm:$0xff] %vm2600, %v2392
  %2606 = vst.msk [vmem:[%s7 + $0x28] sm:$0xff] %vm2600, %v2393
  %2607 = vst.msk [vmem:[%s7 + $0x30] sm:$0xff] %vm2600, %v2394
  %2608 = vst.msk [vmem:[%s7 + $0x38] sm:$0xff] %vm2600, %v2395
  %2609 = vst.msk [vmem:[%s7 + $0x40] sm:$0xff] %vm2600, %v2424
  %2610 = vst.msk [vmem:[%s7 + $0x48] sm:$0xff] %vm2600, %v2425
  %2611 = vst.msk [vmem:[%s7 + $0x50] sm:$0xff] %vm2600, %v2426
  %2612 = vst.msk [vmem:[%s7 + $0x58] sm:$0xff] %vm2600, %v2427
  %2613 = vst.msk [vmem:[%s7 + $0x60] sm:$0xff] %vm2600, %v2456
  %2614 = vst.msk [vmem:[%s7 + $0x68] sm:$0xff] %vm2600, %v2457
  %2615 = vst.msk [vmem:[%s7 + $0x70] sm:$0xff] %vm2600, %v2458
  %2616 = vst.msk [vmem:[%s7 + $0x78] sm:$0xff] %vm2600, %v2459
  %2617 = vst.msk [vmem:[%s7 + $0x80] sm:$0xff] %vm2600, %v2488
  %2618 = vst.msk [vmem:[%s7 + $0x88] sm:$0xff] %vm2600, %v2489
  %2619 = vst.msk [vmem:[%s7 + $0x90] sm:$0xff] %vm2600, %v2490
  %2620 = vst.msk [vmem:[%s7 + $0x98] sm:$0xff] %vm2600, %v2491
  %2621 = vst.msk [vmem:[%s7 + $0xa0] sm:$0xff] %vm2600, %v2520
  %2622 = vst.msk [vmem:[%s7 + $0xa8] sm:$0xff] %vm2600, %v2521
  %2623 = vst.msk [vmem:[%s7 + $0xb0] sm:$0xff] %vm2600, %v2522
  %2624 = vst.msk [vmem:[%s7 + $0xb8] sm:$0xff] %vm2600, %v2523
  %2625 = vst.msk [vmem:[%s7 + $0xc0] sm:$0xff] %vm2600, %v2552
  %2626 = vst.msk [vmem:[%s7 + $0xc8] sm:$0xff] %vm2600, %v2553
  %2627 = vst.msk [vmem:[%s7 + $0xd0] sm:$0xff] %vm2600, %v2554
  %2628 = vst.msk [vmem:[%s7 + $0xd8] sm:$0xff] %vm2600, %v2555
  %2629 = vst.msk [vmem:[%s7 + $0xe0] sm:$0xff] %vm2600, %v2584
  %2630 = vst.msk [vmem:[%s7 + $0xe8] sm:$0xff] %vm2600, %v2585
  %2631 = vst.msk [vmem:[%s7 + $0xf0] sm:$0xff] %vm2600, %v2586
  %2632 = vst.msk [vmem:[%s7 + $0xf8] sm:$0xff] %vm2600, %v2587
  // Predicated region
  $region30: #{tpu_custom_call.1} parent=0 // pred_check
    _
  $region31: #{tpu_custom_call.1} parent=0 // pred_check_branch
    %2634 = sbr.rel (0) target = $region33
  $region32: #{tpu_custom_call.1} parent=0 // pred_region
    _
  $region33: #{tpu_custom_call.1} parent=0 // pred_fallthru
    _
  // Predicated region
  $region34: #{tpu_custom_call.1} parent=0 // pred_check
    _
  $region35: #{tpu_custom_call.1} parent=0 // pred_check_branch
    %2636 = sbr.rel (0) target = $region37
  $region36: #{tpu_custom_call.1} parent=0 // pred_region
    _
  $region37: #{tpu_custom_call.1} parent=0 // pred_fallthru
    _

</llo_original>
